<compile_context>
chip_gen: v5e
topology: v5e:2x2
jax: 0.10.0
libtpu: 0.0.40
codegen_flags: <defaults>
</compile_context>

<pallas_src>
import functools
import math

import jax
import jax.numpy as jnp
from jax.experimental import pallas as pl
from jax.experimental.pallas import tpu as pltpu

_LANE = 128


def _round_up(x, m):
    return (x + m - 1) // m * m


def _pad2d(a, rows, cols):
    r, c = a.shape
    if r == rows and c == cols:
        return a
    return jnp.pad(a, ((0, rows - r), (0, cols - c)))


# ---------------------------------------------------------------------------
# Kernel 1: support = x @ W + b
#   grid = (row blocks, F_in blocks); f32 VMEM accumulator; bias added and the
#   result cast once at the final K step (lane-dense (t, f_out_p) store).
# ---------------------------------------------------------------------------
def _support_kernel(x_ref, w_ref, b_ref, s_ref, acc_ref):
    k = pl.program_id(1)

    @pl.when(k == 0)
    def _():
        acc_ref[...] = jnp.zeros_like(acc_ref)

    acc_ref[...] += jnp.dot(x_ref[...], w_ref[...],
                            preferred_element_type=jnp.float32)

    @pl.when(k == pl.num_programs(1) - 1)
    def _():
        s_ref[...] = (acc_ref[...] + b_ref[...]).astype(s_ref.dtype)


# ---------------------------------------------------------------------------
# Kernel 2: output = adj @ support
#   grid = (row blocks, K blocks over N).  adj streams through VMEM in (t, t)
#   tiles; support is either fully VMEM-resident (read from HBM once) or
#   streamed per-K-block for very large graphs.  f32 accumulator, single cast
#   at the last K step.
# ---------------------------------------------------------------------------
def _aggregate_kernel(adj_ref, s_ref, o_ref, acc_ref, *, block_k,
                      support_resident):
    k = pl.program_id(1)

    @pl.when(k == 0)
    def _():
        acc_ref[...] = jnp.zeros_like(acc_ref)

    if support_resident:
        start = pl.multiple_of(k * block_k, _LANE)
        s_blk = s_ref[pl.ds(start, block_k), :]
    else:
        s_blk = s_ref[...]

    acc_ref[...] += jnp.dot(adj_ref[...], s_blk,
                            preferred_element_type=jnp.float32)

    @pl.when(k == pl.num_programs(1) - 1)
    def _():
        o_ref[...] = acc_ref[...].astype(o_ref.dtype)


@functools.partial(jax.jit, static_argnames=("tile", "compute_dtype"))
def graph_convolution(x, weight, bias, adj, *, tile=512,
                      compute_dtype=jnp.bfloat16):
    """Pallas GCN layer: adj @ (x @ weight + bias)."""
    n, f_in = x.shape
    f_out = weight.shape[1]
    out_dtype = x.dtype
    cdt = jnp.dtype(compute_dtype)
    itemsize = cdt.itemsize

    f_in_p = _round_up(f_in, _LANE)
    f_out_p = _round_up(f_out, _LANE)

    # Node tile: multiple of 128, clamped to the padded node count, and capped
    # at half the padded node count (when N >= 256) so the "parallel" row axis
    # has >= 2 blocks for v7x's dual TensorCores.
    n_lane = _round_up(n, _LANE)
    t = _round_up(max(_LANE, min(int(tile), n_lane)), _LANE)
    if n_lane >= 2 * _LANE:
        t = min(t, max(_LANE, (n_lane // 2) // _LANE * _LANE))
    n_p = _round_up(n, t)

    # K tile over F_in for kernel 1 (keeps huge weight matrices out of VMEM).
    tk = min(f_in_p, 4 * _LANE)

    if bias is None:
        bias = jnp.zeros((f_out,), jnp.float32)

    # Tiny-graph fast path: single-block grids mean the Pallas machinery and
    # 128-lane padding are pure fixed overhead -- plain XLA matmuls win.
    if n_p // t == 1 and f_in_p // tk == 1:
        prec = "highest" if cdt == jnp.float32 else None
        support = (jnp.dot(x.astype(cdt), weight.astype(cdt),
                           preferred_element_type=jnp.float32, precision=prec)
                   + bias.astype(jnp.float32))
        out = jnp.dot(adj.astype(cdt), support.astype(cdt),
                      preferred_element_type=jnp.float32, precision=prec)
        return out.astype(out_dtype)

    # Zero-padding is exact: padded weight rows / adj columns contribute 0 and
    # padded adj rows only produce output rows that are sliced away below.
    x_p = _pad2d(x.astype(cdt), n_p, f_in_p)
    w_p = _pad2d(weight.astype(cdt), f_in_p, f_out_p)
    b_p = _pad2d(bias.astype(jnp.float32).reshape(1, f_out), 1, f_out_p)
    adj_p = _pad2d(adj.astype(cdt), n_p, n_p)

    out_itemsize = jnp.dtype(out_dtype).itemsize
    acc_bytes = t * f_out_p * 4

    def _vmem_limit(plan_bytes):
        # Fit the actual plan with headroom; cap at 48 MiB so the same config
        # is safe on v7x (64 MiB physical VMEM) and trivial on v5e/v6e.
        return int(min(max(plan_bytes * 5 // 4 + (4 << 20), 32 << 20), 48 << 20))

    # --- Kernel 1: support = x @ W + b --------------------------------------
    k1_plan = (2 * t * tk * itemsize            # x tiles (double-buffered)
               + 2 * tk * f_out_p * itemsize    # W tiles
               + 2 * f_out_p * 4                # bias
               + acc_bytes
               + 2 * t * f_out_p * itemsize)    # support out tiles
    support = pl.pallas_call(
        _support_kernel,
        out_shape=jax.ShapeDtypeStruct((n_p, f_out_p), cdt),
        grid=(n_p // t, f_in_p // tk),
        in_specs=[
            pl.BlockSpec((t, tk), lambda i, k: (i, k)),
            pl.BlockSpec((tk, f_out_p), lambda i, k: (k, 0)),
            pl.BlockSpec((1, f_out_p), lambda i, k: (0, 0)),
        ],
        out_specs=pl.BlockSpec((t, f_out_p), lambda i, k: (i, 0)),
        scratch_shapes=[pltpu.VMEM((t, f_out_p), jnp.float32)],
        compiler_params=pltpu.CompilerParams(
            dimension_semantics=("parallel", "arbitrary"),
            vmem_limit_bytes=_vmem_limit(k1_plan)),
    )(x_p, w_p, b_p)

    # --- Kernel 2: output = adj @ support ------------------------------------
    support_bytes = n_p * f_out_p * itemsize
    support_resident = support_bytes <= (8 << 20)  # <=16 MiB even if 2x-buffered

    if support_resident:
        # Whole support matrix VMEM-resident: read from HBM exactly once.
        support_spec = pl.BlockSpec((n_p, f_out_p), lambda i, k: (0, 0))
        sup_plan = 2 * support_bytes
    else:
        # Streaming fallback for very large graphs (re-reads support n_p/t x).
        support_spec = pl.BlockSpec((t, f_out_p), lambda i, k: (k, 0))
        sup_plan = 2 * t * f_out_p * itemsize

    k2_plan = (2 * t * t * itemsize              # adj tiles (double-buffered)
               + sup_plan
               + acc_bytes
               + 2 * t * f_out_p * out_itemsize)  # output tiles

    out_p = pl.pallas_call(
        functools.partial(_aggregate_kernel, block_k=t,
                          support_resident=support_resident),
        out_shape=jax.ShapeDtypeStruct((n_p, f_out_p), out_dtype),
        grid=(n_p // t, n_p // t),
        in_specs=[
            pl.BlockSpec((t, t), lambda i, k: (i, k)),
            support_spec,
        ],
        out_specs=pl.BlockSpec((t, f_out_p), lambda i, k: (i, 0)),
        scratch_shapes=[pltpu.VMEM((t, f_out_p), jnp.float32)],
        compiler_params=pltpu.CompilerParams(
            dimension_semantics=("parallel", "arbitrary"),
            vmem_limit_bytes=_vmem_limit(k2_plan)),
    )(adj_p, support)

    return out_p[:n, :f_out]


if __name__ == "__main__":
    # Module config (synthetic, deterministic init mirroring reset_parameters).
    N = 512      # number of graph nodes (>=2 row blocks -> exercises the grid)
    F_IN = 96    # in_features  (pads to 128 -> exercises feature padding)
    F_OUT = 48   # out_features (pads to 128)

    key = jax.random.PRNGKey(0)
    kx, kadj, kw, kb = jax.random.split(key, 4)

    stdv = 1.0 / math.sqrt(F_OUT)
    weight = jax.random.uniform(kw, (F_IN, F_OUT), jnp.float32, -stdv, stdv)
    bias = jax.random.uniform(kb, (F_OUT,), jnp.float32, -stdv, stdv)

    x = jax.random.normal(kx, (N, F_IN), jnp.float32)
    # Simple synthetic (dense, row-normalized) adjacency with self loops.
    adj_raw = (jax.random.uniform(kadj, (N, N)) > 0.9).astype(jnp.float32)
    adj_raw = adj_raw + jnp.eye(N, dtype=jnp.float32)
    adj = adj_raw / jnp.sum(adj_raw, axis=1, keepdims=True)

    # Reference in plain JAX (module semantics) at full matmul precision.
    ref = jnp.matmul(adj, jnp.matmul(x, weight, precision="highest") + bias,
                     precision="highest")

    # Default path: bf16 operands on the dominant adj stream, f32 accumulation.
    out_bf16 = jax.block_until_ready(graph_convolution(x, weight, bias, adj))
    assert out_bf16.shape == (N, F_OUT)
    assert jnp.allclose(out_bf16, ref, atol=5e-2, rtol=5e-2), \
        "bf16 mismatch vs reference"

    # f32 compute path: module numerics to tight tolerance.
    out_f32 = jax.block_until_ready(
        graph_convolution(x, weight, bias, adj, compute_dtype=jnp.float32))
    assert out_f32.shape == (N, F_OUT)
    assert jnp.allclose(out_f32, ref, atol=5e-4, rtol=5e-4), \
        "f32 mismatch vs reference"

    print("KERNEL_OK")
</pallas_src>

<mosaic_0001>
module attributes {stable_mosaic.version = 11 : i64} {
  func.func @_support_kernel(%arg0: i32, %arg1: i32, %arg2: memref<256x128xbf16, #tpu.memory_space<vmem>>, %arg3: memref<128x128xbf16, #tpu.memory_space<vmem>>, %arg4: memref<1x128xf32, #tpu.memory_space<vmem>>, %arg5: memref<256x128xbf16, #tpu.memory_space<vmem>>, %arg6: memref<256x128xf32, #tpu.memory_space<vmem>>) attributes {dimension_semantics = [#tpu.dimension_semantics<parallel>, #tpu.dimension_semantics<arbitrary>], iteration_bounds = array<i64: 2, 1>, scalar_prefetch = 0 : i64, scratch_operands = 1 : i64, tpu.core_type = #tpu.core_type<tc>, window_params = [{transform_indices = @transform_0, window_bounds = array<i64: 256, 128>}, {transform_indices = @transform_1, window_bounds = array<i64: 128, 128>}, {pipeline_mode = #tpu.pipeline_mode<synchronous>, transform_indices = @transform_2, window_bounds = array<i64: 1, 128>}, {transform_indices = @transform_3, window_bounds = array<i64: 256, 128>}]} {
    %c0_i32 = arith.constant 0 : i32
    %0 = arith.cmpi eq, %arg1, %c0_i32 : i32
    %1 = arith.extui %0 : i1 to i32
    %c0_i32_0 = arith.constant 0 : i32
    %2 = arith.cmpi ne, %1, %c0_i32_0 : i32
    scf.if %2 {
      %cst_10 = arith.constant 0.000000e+00 : f32
      %12 = vector.broadcast %cst_10 : f32 to vector<256x128xf32>
      %c0_11 = arith.constant 0 : index
      %c0_12 = arith.constant 0 : index
      %13 = vector.load %arg6[%c0_11, %c0_12] : memref<256x128xf32, #tpu.memory_space<vmem>>, vector<256x128xf32>
      tpu.vector_store %arg6[%c0_11, %c0_12], %12 {strides = array<i32>} : memref<256x128xf32, #tpu.memory_space<vmem>>, vector<256x128xf32>,
    } else {
    }
    %c0 = arith.constant 0 : index
    %c0_1 = arith.constant 0 : index
    %3 = vector.load %arg6[%c0, %c0_1] : memref<256x128xf32, #tpu.memory_space<vmem>>, vector<256x128xf32>
    %c0_2 = arith.constant 0 : index
    %c0_3 = arith.constant 0 : index
    %4 = vector.load %arg2[%c0_2, %c0_3] : memref<256x128xbf16, #tpu.memory_space<vmem>>, vector<256x128xbf16>
    %c0_4 = arith.constant 0 : index
    %c0_5 = arith.constant 0 : index
    %5 = vector.load %arg3[%c0_4, %c0_5] : memref<128x128xbf16, #tpu.memory_space<vmem>>, vector<128x128xbf16>
    %cst = arith.constant dense<0.000000e+00> : vector<256x128xf32>
    %6 = tpu.matmul %4, %5, %cst {dimension_numbers = #tpu.dot_dimension_numbers<[1], [0], [0], [1], [0, 0, 1, 1], [], []>} : vector<256x128xbf16>, vector<128x128xbf16>, vector<256x128xf32> -> vector<256x128xf32>
    %7 = arith.addf %3, %6 : vector<256x128xf32>
    %c0_6 = arith.constant 0 : index
    %c0_7 = arith.constant 0 : index
    %8 = vector.load %arg6[%c0_6, %c0_7] : memref<256x128xf32, #tpu.memory_space<vmem>>, vector<256x128xf32>
    tpu.vector_store %arg6[%c0_6, %c0_7], %7 {strides = array<i32>} : memref<256x128xf32, #tpu.memory_space<vmem>>, vector<256x128xf32>,
    %c0_i32_8 = arith.constant 0 : i32
    %9 = arith.cmpi eq, %arg1, %c0_i32_8 : i32
    %10 = arith.extui %9 : i1 to i32
    %c0_i32_9 = arith.constant 0 : i32
    %11 = arith.cmpi ne, %10, %c0_i32_9 : i32
    scf.if %11 {
      %c0_10 = arith.constant 0 : index
      %c0_11 = arith.constant 0 : index
      %12 = vector.load %arg6[%c0_10, %c0_11] : memref<256x128xf32, #tpu.memory_space<vmem>>, vector<256x128xf32>
      %c0_12 = arith.constant 0 : index
      %c0_13 = arith.constant 0 : index
      %13 = vector.load %arg4[%c0_12, %c0_13] : memref<1x128xf32, #tpu.memory_space<vmem>>, vector<1x128xf32>
      %14 = vector.broadcast %13 : vector<1x128xf32> to vector<256x128xf32>
      %15 = arith.addf %12, %14 : vector<256x128xf32>
      %16 = arith.truncf %15 : vector<256x128xf32> to vector<256x128xbf16>
      %c0_14 = arith.constant 0 : index
      %c0_15 = arith.constant 0 : index
      %17 = vector.load %arg5[%c0_14, %c0_15] : memref<256x128xbf16, #tpu.memory_space<vmem>>, vector<256x128xbf16>
      tpu.vector_store %arg5[%c0_14, %c0_15], %16 {strides = array<i32>} : memref<256x128xbf16, #tpu.memory_space<vmem>>, vector<256x128xbf16>,
    } else {
    }
    return
  }
  func.func @transform_0(%arg0: i32, %arg1: i32) -> (i32, i32) {
    %c0_i32 = arith.constant 0 : i32
    return %arg0, %arg1 : i32, i32
  }
  func.func @transform_1(%arg0: i32, %arg1: i32) -> (i32, i32) {
    %c0_i32 = arith.constant 0 : i32
    %c0_i32_0 = arith.constant 0 : i32
    return %arg1, %c0_i32 : i32, i32
  }
  func.func @transform_2(%arg0: i32, %arg1: i32) -> (i32, i32) {
    %c0_i32 = arith.constant 0 : i32
    %c0_i32_0 = arith.constant 0 : i32
    %c0_i32_1 = arith.constant 0 : i32
    return %c0_i32, %c0_i32_0 : i32, i32
  }
  func.func @transform_3(%arg0: i32, %arg1: i32) -> (i32, i32) {
    %c0_i32 = arith.constant 0 : i32
    %c0_i32_0 = arith.constant 0 : i32
    return %arg0, %c0_i32 : i32, i32
  }
}

module attributes {stable_mosaic.version = 11 : i64} {
  func.func @_aggregate_kernel(%arg0: i32, %arg1: i32, %arg2: memref<256x256xbf16, #tpu.memory_space<vmem>>, %arg3: memref<512x128xbf16, #tpu.memory_space<vmem>>, %arg4: memref<256x128xf32, #tpu.memory_space<vmem>>, %arg5: memref<256x128xf32, #tpu.memory_space<vmem>>) attributes {dimension_semantics = [#tpu.dimension_semantics<parallel>, #tpu.dimension_semantics<arbitrary>], iteration_bounds = array<i64: 2, 2>, scalar_prefetch = 0 : i64, scratch_operands = 1 : i64, tpu.core_type = #tpu.core_type<tc>, window_params = [{transform_indices = @transform_0, window_bounds = array<i64: 256, 256>}, {pipeline_mode = #tpu.pipeline_mode<synchronous>, transform_indices = @transform_1, window_bounds = array<i64: 512, 128>}, {transform_indices = @transform_2, window_bounds = array<i64: 256, 128>}]} {
    %c0_i32 = arith.constant 0 : i32
    %0 = arith.cmpi eq, %arg1, %c0_i32 : i32
    %1 = arith.extui %0 : i1 to i32
    %c0_i32_0 = arith.constant 0 : i32
    %2 = arith.cmpi ne, %1, %c0_i32_0 : i32
    scf.if %2 {
      %cst_8 = arith.constant 0.000000e+00 : f32
      %15 = vector.broadcast %cst_8 : f32 to vector<256x128xf32>
      %c0_9 = arith.constant 0 : index
      %c0_10 = arith.constant 0 : index
      %16 = vector.load %arg5[%c0_9, %c0_10] : memref<256x128xf32, #tpu.memory_space<vmem>>, vector<256x128xf32>
      tpu.vector_store %arg5[%c0_9, %c0_10], %15 {strides = array<i32>} : memref<256x128xf32, #tpu.memory_space<vmem>>, vector<256x128xf32>,
    } else {
    }
    %c256_i32 = arith.constant 256 : i32
    %3 = arith.muli %arg1, %c256_i32 : i32
    %4 = tpu.assume_multiple %3, 128 : i32
    %5 = arith.index_cast %4 : i32 to index
    %c0 = arith.constant 0 : index
    %6 = vector.load %arg3[%5, %c0] : memref<512x128xbf16, #tpu.memory_space<vmem>>, vector<256x128xbf16>
    %c0_1 = arith.constant 0 : index
    %c0_2 = arith.constant 0 : index
    %7 = vector.load %arg5[%c0_1, %c0_2] : memref<256x128xf32, #tpu.memory_space<vmem>>, vector<256x128xf32>
    %c0_3 = arith.constant 0 : index
    %c0_4 = arith.constant 0 : index
    %8 = vector.load %arg2[%c0_3, %c0_4] : memref<256x256xbf16, #tpu.memory_space<vmem>>, vector<256x256xbf16>
    %cst = arith.constant dense<0.000000e+00> : vector<256x128xf32>
    %9 = tpu.matmul %8, %6, %cst {dimension_numbers = #tpu.dot_dimension_numbers<[1], [0], [0], [1], [0, 0, 1, 1], [], []>} : vector<256x256xbf16>, vector<256x128xbf16>, vector<256x128xf32> -> vector<256x128xf32>
    %10 = arith.addf %7, %9 : vector<256x128xf32>
    %c0_5 = arith.constant 0 : index
    %c0_6 = arith.constant 0 : index
    %11 = vector.load %arg5[%c0_5, %c0_6] : memref<256x128xf32, #tpu.memory_space<vmem>>, vector<256x128xf32>
    tpu.vector_store %arg5[%c0_5, %c0_6], %10 {strides = array<i32>} : memref<256x128xf32, #tpu.memory_space<vmem>>, vector<256x128xf32>,
    %c1_i32 = arith.constant 1 : i32
    %12 = arith.cmpi eq, %arg1, %c1_i32 : i32
    %13 = arith.extui %12 : i1 to i32
    %c0_i32_7 = arith.constant 0 : i32
    %14 = arith.cmpi ne, %13, %c0_i32_7 : i32
    scf.if %14 {
      %c0_8 = arith.constant 0 : index
      %c0_9 = arith.constant 0 : index
      %15 = vector.load %arg5[%c0_8, %c0_9] : memref<256x128xf32, #tpu.memory_space<vmem>>, vector<256x128xf32>
      %c0_10 = arith.constant 0 : index
      %c0_11 = arith.constant 0 : index
      %16 = vector.load %arg4[%c0_10, %c0_11] : memref<256x128xf32, #tpu.memory_space<vmem>>, vector<256x128xf32>
      tpu.vector_store %arg4[%c0_10, %c0_11], %15 {strides = array<i32>} : memref<256x128xf32, #tpu.memory_space<vmem>>, vector<256x128xf32>,
    } else {
    }
    return
  }
  func.func @transform_0(%arg0: i32, %arg1: i32) -> (i32, i32) {
    %c0_i32 = arith.constant 0 : i32
    return %arg0, %arg1 : i32, i32
  }
  func.func @transform_1(%arg0: i32, %arg1: i32) -> (i32, i32) {
    %c0_i32 = arith.constant 0 : i32
    %c0_i32_0 = arith.constant 0 : i32
    %c0_i32_1 = arith.constant 0 : i32
    return %c0_i32, %c0_i32_0 : i32, i32
  }
  func.func @transform_2(%arg0: i32, %arg1: i32) -> (i32, i32) {
    %c0_i32 = arith.constant 0 : i32
    %c0_i32_0 = arith.constant 0 : i32
    return %arg0, %c0_i32 : i32, i32
  }
}

</mosaic_0001>

<llo_original>
// kernel: graph_convolution.2
$region0: #{graph_convolution.2}
  #allocation0 [shape = 'u32[]', space=smem, size = 0x4, offset = 0x4, fixed_abs, tag = 'smem constant byte address 0x4 - core index']
  #allocation1 [shape = 'u32[72,128]{1,0:T(1,128)}', space=vmem, size = 0x9000, scoped, tag = 'internal scratch']
  #allocation2 [shape = 'f32[256,128]{1,0:T(8,128)}', space=vmem, size = 0x20000, scoped, tag = 'scratch operand']
  %s0 = inlined_call_operand.vmem [shape: bf16[512,128], index: 0, kind: input, shape index: {}]
  %s1 = inlined_call_operand.vmem [shape: bf16[128,128], index: 1, kind: input, shape index: {}]
  %s2 = inlined_call_operand.vmem [shape: f32[1,128], index: 2, kind: input, shape index: {}]
  %s3 = inlined_call_operand.vmem [shape: bf16[512,128], index: 3, kind: output, shape index: {}]
  %s4 = sld [smem:[#allocation0]]
  $region53: #{graph_convolution.2} parent=0
    _
  %s6 = ssub.s32 1, %s4
  %s7 = scalar_select 0, %s6, %s4
  loop: start=0, step=1, limit=4
  $region2: #{graph_convolution.2} parent=0 // loop_pre_header
    _
  $region3: #{graph_convolution.2} parent=0 // loop_header
    %s9 = sphi 0, %s13
    %p10 = scmp.ge.s32.totalorder %s9, 4
    %s16 = sphi 0, %s28
    %s17 = sphi 0, %s24
    %s18 = sphi 0, %s16
    %s19 = sphi 0, %s17
    %s20 = sphi 0, %s18
    %s21 = sphi 0, %s19
    %s33 = sphi 0, %s35
    %s36 = sphi 0, %s33
    %s37 = sphi 0, %s36
    %s53 = sphi 0, %s37
    %s59 = sphi 0, %s61
    %s62 = sphi 0, %s59
    %s63 = sphi 0, %s62
    %s79 = sphi 0, %s63
    %s83 = sphi 0, %s83
    %s85 = sphi 0, %s83
    %s86 = sphi 0, %s85
    %s100 = sphi 0, %s86
    %s106 = sphi 0, %s108
    %s109 = sphi 0, %s106
    %s110 = sphi 0, %s109
    %s126 = sphi 0, %s110
  $region4: #{graph_convolution.2} parent=0 // loop_header_branch
    %12 = sbr.rel (%p10) target = $region8
  $region5: #{graph_convolution.2} parent=0 // loop_body
    %s14 = ssub.s32 %s9, 1
    %s15 = ssub.s32 %s9, 2
    %s22 = sadd.s32 1, %s17
    %p23 = scmp.ge.s32.totalorder %s22, 1
    %s24 = scalar_select %p23, 0, %s22
    %s25 = sadd.s32 1, %s16
    %s26 = scalar_select %p23, %s25, %s16
    %p27 = scmp.ge.s32.totalorder %s26, 2
    %s28 = scalar_select %p27, 0, %s26
    %s29 = ssub.s32 %s16, %s28
    %s30 = ssub.s32 %s17, %s24
    %s31 = sor.u32 %s29, %s30
    %p32 = scmp.eq.s32.totalorder %s31, 0
    %s34 = sadd.s32 %s33, 1
    %s35 = scalar_select %p32, %s33, %s34
    %p38 = pneg %p32
    %p39 = scmp.eq.s32.totalorder %s9, 1
    %p40 = por %p38, %p39
    %p41 = scmp.ne.s32.totalorder %s33, %s36
    %p42 = scmp.eq.s32.totalorder %s9, 0
    %p43 = por %p41, %p42
    %p44 = scmp.ne.s32.totalorder %s33, %s36
    %p45 = scmp.eq.s32.totalorder %s14, 1
    %p46 = por %p44, %p45
    %p47 = scmp.ne.s32.totalorder %s36, %s37
    %p48 = scmp.eq.s32.totalorder %s14, 0
    %p49 = por %p47, %p48
    %p50 = scmp.ne.s32.totalorder %s36, %s37
    %p51 = scmp.eq.s32.totalorder %s15, 1
    %p52 = por %p50, %p51
    %p54 = scmp.ne.s32.totalorder %s37, %s53
    %p55 = scmp.eq.s32.totalorder %s15, 0
    %p56 = por %p54, %p55
    %s57 = ssub.s32 %s17, %s24
    %p58 = scmp.eq.s32.totalorder %s57, 0
    %s60 = sadd.s32 %s59, 1
    %s61 = scalar_select %p58, %s59, %s60
    %p64 = pneg %p58
    %p65 = scmp.eq.s32.totalorder %s9, 1
    %p66 = por %p64, %p65
    %p67 = scmp.ne.s32.totalorder %s59, %s62
    %p68 = scmp.eq.s32.totalorder %s9, 0
    %p69 = por %p67, %p68
    %p70 = scmp.ne.s32.totalorder %s59, %s62
    %p71 = scmp.eq.s32.totalorder %s14, 1
    %p72 = por %p70, %p71
    %p73 = scmp.ne.s32.totalorder %s62, %s63
    %p74 = scmp.eq.s32.totalorder %s14, 0
    %p75 = por %p73, %p74
    %p76 = scmp.ne.s32.totalorder %s62, %s63
    %p77 = scmp.eq.s32.totalorder %s15, 1
    %p78 = por %p76, %p77
    %p80 = scmp.ne.s32.totalorder %s63, %s79
    %p81 = scmp.eq.s32.totalorder %s15, 0
    %p82 = por %p80, %p81
    %s84 = sadd.s32 %s83, 1
    %p87 = scmp.eq.s32.totalorder %s9, 1
    %p88 = scmp.ne.s32.totalorder %s83, %s85
    %p89 = scmp.eq.s32.totalorder %s9, 0
    %p90 = por %p88, %p89
    %p91 = scmp.ne.s32.totalorder %s83, %s85
    %p92 = scmp.eq.s32.totalorder %s14, 1
    %p93 = por %p91, %p92
    %p94 = scmp.ne.s32.totalorder %s85, %s86
    %p95 = scmp.eq.s32.totalorder %s14, 0
    %p96 = por %p94, %p95
    %p97 = scmp.ne.s32.totalorder %s85, %s86
    %p98 = scmp.eq.s32.totalorder %s15, 1
    %p99 = por %p97, %p98
    %p101 = scmp.ne.s32.totalorder %s86, %s100
    %p102 = scmp.eq.s32.totalorder %s15, 0
    %p103 = por %p101, %p102
    %s104 = ssub.s32 %s16, %s28
    %p105 = scmp.eq.s32.totalorder %s104, 0
    %s107 = sadd.s32 %s106, 1
    %s108 = scalar_select %p105, %s106, %s107
    %p111 = pneg %p105
    %p112 = scmp.eq.s32.totalorder %s9, 1
    %p113 = por %p111, %p112
    %p114 = scmp.ne.s32.totalorder %s106, %s109
    %p115 = scmp.eq.s32.totalorder %s9, 0
    %p116 = por %p114, %p115
    %p117 = scmp.ne.s32.totalorder %s106, %s109
    %p118 = scmp.eq.s32.totalorder %s14, 1
    %p119 = por %p117, %p118
    %p120 = scmp.ne.s32.totalorder %s109, %s110
    %p121 = scmp.eq.s32.totalorder %s14, 0
    %p122 = por %p120, %p121
    %p123 = scmp.ne.s32.totalorder %s109, %s110
    %p124 = scmp.eq.s32.totalorder %s15, 1
    %p125 = por %p123, %p124
    %p127 = scmp.ne.s32.totalorder %s110, %s126
    %p128 = scmp.eq.s32.totalorder %s15, 0
    %p129 = por %p127, %p128
    %p130 = scmp.le.s32.totalorder 1, %s9
    %p131 = scmp.lt.s32.totalorder %s9, 3
    %p132 = pnand %p130, %p131
    %p133 = pneg %p132
    // Predicated region
    $region9: #{graph_convolution.2} parent=5 // pred_check
      _
    $region10: #{graph_convolution.2} parent=5 // pred_check_branch
      %135 = sbr.rel (%p132) target = $region12
    $region11: #{graph_convolution.2} parent=5 // pred_region
      %s136 = ssub.s32 %s9, 1
      // Predicated region
      $region13: #{graph_convolution.2} parent=11 // pred_check
        %p137 = pneg %p75
      $region14: #{graph_convolution.2} parent=11 // pred_check_branch
        %139 = sbr.rel (%p137) target = $region16
      $region15: #{graph_convolution.2} parent=11 // pred_region
        %s140 = smul.u32 16, %s19
        %p141 = scmp.lt.s32.totalorder %s140, 15
        %s142 = scalar_select %p141, %s140, 15
        %s143 = smul.addr %s142, 4
        %s144 = scalar_lea.vmem %s1, %s143
        %s145 = smul.u32 16, %s19
      $region16: #{graph_convolution.2} parent=11 // pred_fallthru
        _
      // Predicated region
      $region17: #{graph_convolution.2} parent=11 // pred_check
        %p146 = pneg %p96
      $region18: #{graph_convolution.2} parent=11 // pred_check_branch
        %148 = sbr.rel (%p146) target = $region20
      $region19: #{graph_convolution.2} parent=11 // pred_region
        _
      $region20: #{graph_convolution.2} parent=11 // pred_fallthru
        _
    $region12: #{graph_convolution.2} parent=5 // pred_fallthru
      _
    %p149 = scmp.lt.s32.totalorder %s9, 2
    // Predicated region
    $region21: #{graph_convolution.2} parent=5 // pred_check
      %p150 = pneg %p149
    $region22: #{graph_convolution.2} parent=5 // pred_check_branch
      %152 = sbr.rel (%p150) target = $region24
    $region23: #{graph_convolution.2} parent=5 // pred_region
      // Predicated region
      $region25: #{graph_convolution.2} parent=23 // pred_check
        %p153 = pneg %p43
      $region26: #{graph_convolution.2} parent=23 // pred_check_branch
        %155 = sbr.rel (%p153) target = $region28
      $region27: #{graph_convolution.2} parent=23 // pred_region
        %s156 = smul.u32 32, %s16
        %p157 = scmp.lt.s32.totalorder %s156, 63
        %s158 = scalar_select %p157, %s156, 63
        %p159 = scmp.lt.s32.totalorder %s17, 0
        %s160 = scalar_select %p159, %s17, 0
        %s161 = sadd.s32 %s160, %s158
        %s162 = smul.addr %s161, 4
        %s163 = scalar_lea.vmem %s0, %s162
        %s164 = smul.u32 32, %s16
      $region28: #{graph_convolution.2} parent=23 // pred_fallthru
        _
    $region24: #{graph_convolution.2} parent=5 // pred_fallthru
      _
    %p165 = scmp.le.s32.totalorder 1, %s9
    %p166 = scmp.lt.s32.totalorder %s9, 3
    %p167 = pnand %p165, %p166
    %p168 = pneg %p167
    // Predicated region
    $region29: #{graph_convolution.2} parent=5 // pred_check
      _
    $region30: #{graph_convolution.2} parent=5 // pred_check_branch
      %170 = sbr.rel (%p167) target = $region32
    $region31: #{graph_convolution.2} parent=5 // pred_region
      %s171 = ssub.s32 %s9, 1
      %s172 = smul.u32 32, %s18
      %p173 = scmp.lt.s32.totalorder %s172, 63
      %s174 = scalar_select %p173, %s172, 63
      %p175 = scmp.lt.s32.totalorder %s19, 0
      %s176 = scalar_select %p175, %s19, 0
      %s177 = sadd.s32 %s176, %s174
      %s178 = smul.addr %s177, 4
      %s179 = scalar_lea.vmem %s0, %s178
      %p180 = pneg %p49
      %p181 = pneg %p46
      %s182 = smul.u32 16, %s19
      %p183 = scmp.lt.s32.totalorder %s182, 15
      %s184 = scalar_select %p183, %s182, 15
      %s185 = smul.addr %s184, 4
      %s186 = scalar_lea.vmem %s1, %s185
      %p187 = pneg %p75
      %p188 = pneg %p72
      %p189 = pneg %p96
      %p190 = pneg %p93
      %p191 = pneg %p122
      %p192 = pneg %p119
      %s193 = smul.u32 32, %s18
      %p194 = scmp.lt.s32.totalorder %s193, 63
      %s195 = scalar_select %p194, %s193, 63
      %s196 = smul.addr %s195, 4
      %s197 = scalar_lea.vmem %s3, %s196
      %s198 = smul.u32 32, %s18
      %p199 = scmp.lt.s32.totalorder %s198, 63
      %s200 = scalar_select %p199, %s198, 63
      %p201 = scmp.lt.s32.totalorder %s19, 0
      %s202 = scalar_select %p201, %s19, 0
      %s203 = sadd.s32 %s202, %s200
      %s204 = smul.addr %s203, 4
      %s205 = scalar_lea.vmem %s0, %s204
      %s206 = smul.u32 32, %s18
      %s207 = smul.u32 16, %s19
      %p208 = scmp.lt.s32.totalorder %s207, 15
      %s209 = scalar_select %p208, %s207, 15
      %s210 = smul.addr %s209, 4
      %s211 = scalar_lea.vmem %s1, %s210
      %s212 = smul.u32 16, %s19
      %s213 = smul.u32 32, %s18
      %p214 = scmp.lt.s32.totalorder %s213, 63
      %s215 = scalar_select %p214, %s213, 63
      %s216 = smul.addr %s215, 4
      %s217 = scalar_lea.vmem %s3, %s216
      %s218 = smul.u32 32, %s18
      %p219 = scmp.eq.s32.totalorder %s19, 0
      // Predicated region
      $region33: #{graph_convolution.2} parent=31 // pred_check
        %p220 = pneg %p219
      $region34: #{graph_convolution.2} parent=31 // pred_check_branch
        %222 = sbr.rel (%p220) target = $region36
      $region35: #{graph_convolution.2} parent=31 // pred_region
        %223 = vst [vmem:[#allocation2] sm:$0xff] 0.0
        %224 = vst [vmem:[#allocation2 + $0x8] sm:$0xff] 0.0
        %225 = vst [vmem:[#allocation2 + $0x10] sm:$0xff] 0.0
        %226 = vst [vmem:[#allocation2 + $0x18] sm:$0xff] 0.0
        %227 = vst [vmem:[#allocation2 + $0x20] sm:$0xff] 0.0
        %228 = vst [vmem:[#allocation2 + $0x28] sm:$0xff] 0.0
        %229 = vst [vmem:[#allocation2 + $0x30] sm:$0xff] 0.0
        %230 = vst [vmem:[#allocation2 + $0x38] sm:$0xff] 0.0
        %231 = vst [vmem:[#allocation2 + $0x40] sm:$0xff] 0.0
        %232 = vst [vmem:[#allocation2 + $0x48] sm:$0xff] 0.0
        %233 = vst [vmem:[#allocation2 + $0x50] sm:$0xff] 0.0
        %234 = vst [vmem:[#allocation2 + $0x58] sm:$0xff] 0.0
        %235 = vst [vmem:[#allocation2 + $0x60] sm:$0xff] 0.0
        %236 = vst [vmem:[#allocation2 + $0x68] sm:$0xff] 0.0
        %237 = vst [vmem:[#allocation2 + $0x70] sm:$0xff] 0.0
        %238 = vst [vmem:[#allocation2 + $0x78] sm:$0xff] 0.0
        %239 = vst [vmem:[#allocation2 + $0x80] sm:$0xff] 0.0
        %240 = vst [vmem:[#allocation2 + $0x88] sm:$0xff] 0.0
        %241 = vst [vmem:[#allocation2 + $0x90] sm:$0xff] 0.0
        %242 = vst [vmem:[#allocation2 + $0x98] sm:$0xff] 0.0
        %243 = vst [vmem:[#allocation2 + $0xa0] sm:$0xff] 0.0
        %244 = vst [vmem:[#allocation2 + $0xa8] sm:$0xff] 0.0
        %245 = vst [vmem:[#allocation2 + $0xb0] sm:$0xff] 0.0
        %246 = vst [vmem:[#allocation2 + $0xb8] sm:$0xff] 0.0
        %247 = vst [vmem:[#allocation2 + $0xc0] sm:$0xff] 0.0
        %248 = vst [vmem:[#allocation2 + $0xc8] sm:$0xff] 0.0
        %249 = vst [vmem:[#allocation2 + $0xd0] sm:$0xff] 0.0
        %250 = vst [vmem:[#allocation2 + $0xd8] sm:$0xff] 0.0
        %251 = vst [vmem:[#allocation2 + $0xe0] sm:$0xff] 0.0
        %252 = vst [vmem:[#allocation2 + $0xe8] sm:$0xff] 0.0
        %253 = vst [vmem:[#allocation2 + $0xf0] sm:$0xff] 0.0
        %254 = vst [vmem:[#allocation2 + $0xf8] sm:$0xff] 0.0
      $region36: #{graph_convolution.2} parent=31 // pred_fallthru
        _
      %v255 = vld [vmem:[#allocation2] sm:$0xff]
      %v256 = vld [vmem:[#allocation2 + $0x8] sm:$0xff]
      %v257 = vld [vmem:[#allocation2 + $0x10] sm:$0xff]
      %v258 = vld [vmem:[#allocation2 + $0x18] sm:$0xff]
      %v259 = vld [vmem:[#allocation2 + $0x20] sm:$0xff]
      %v260 = vld [vmem:[#allocation2 + $0x28] sm:$0xff]
      %v261 = vld [vmem:[#allocation2 + $0x30] sm:$0xff]
      %v262 = vld [vmem:[#allocation2 + $0x38] sm:$0xff]
      %v263 = vld [vmem:[#allocation2 + $0x40] sm:$0xff]
      %v264 = vld [vmem:[#allocation2 + $0x48] sm:$0xff]
      %v265 = vld [vmem:[#allocation2 + $0x50] sm:$0xff]
      %v266 = vld [vmem:[#allocation2 + $0x58] sm:$0xff]
      %v267 = vld [vmem:[#allocation2 + $0x60] sm:$0xff]
      %v268 = vld [vmem:[#allocation2 + $0x68] sm:$0xff]
      %v269 = vld [vmem:[#allocation2 + $0x70] sm:$0xff]
      %v270 = vld [vmem:[#allocation2 + $0x78] sm:$0xff]
      %v271 = vld [vmem:[#allocation2 + $0x80] sm:$0xff]
      %v272 = vld [vmem:[#allocation2 + $0x88] sm:$0xff]
      %v273 = vld [vmem:[#allocation2 + $0x90] sm:$0xff]
      %v274 = vld [vmem:[#allocation2 + $0x98] sm:$0xff]
      %v275 = vld [vmem:[#allocation2 + $0xa0] sm:$0xff]
      %v276 = vld [vmem:[#allocation2 + $0xa8] sm:$0xff]
      %v277 = vld [vmem:[#allocation2 + $0xb0] sm:$0xff]
      %v278 = vld [vmem:[#allocation2 + $0xb8] sm:$0xff]
      %v279 = vld [vmem:[#allocation2 + $0xc0] sm:$0xff]
      %v280 = vld [vmem:[#allocation2 + $0xc8] sm:$0xff]
      %v281 = vld [vmem:[#allocation2 + $0xd0] sm:$0xff]
      %v282 = vld [vmem:[#allocation2 + $0xd8] sm:$0xff]
      %v283 = vld [vmem:[#allocation2 + $0xe0] sm:$0xff]
      %v284 = vld [vmem:[#allocation2 + $0xe8] sm:$0xff]
      %v285 = vld [vmem:[#allocation2 + $0xf0] sm:$0xff]
      %v286 = vld [vmem:[#allocation2 + $0xf8] sm:$0xff]
      %v287 = vld [vmem:[%s205] sm:$0xf]
      %v288 = vld [vmem:[%s205 + $0x4] sm:$0xf]
      %v289 = vld [vmem:[%s205 + $0x8] sm:$0xf]
      %v290 = vld [vmem:[%s205 + $0xc] sm:$0xf]
      %v291 = vld [vmem:[%s205 + $0x10] sm:$0xf]
      %v292 = vld [vmem:[%s205 + $0x14] sm:$0xf]
      %v293 = vld [vmem:[%s205 + $0x18] sm:$0xf]
      %v294 = vld [vmem:[%s205 + $0x1c] sm:$0xf]
      %v295 = vld [vmem:[%s205 + $0x20] sm:$0xf]
      %v296 = vld [vmem:[%s205 + $0x24] sm:$0xf]
      %v297 = vld [vmem:[%s205 + $0x28] sm:$0xf]
      %v298 = vld [vmem:[%s205 + $0x2c] sm:$0xf]
      %v299 = vld [vmem:[%s205 + $0x30] sm:$0xf]
      %v300 = vld [vmem:[%s205 + $0x34] sm:$0xf]
      %v301 = vld [vmem:[%s205 + $0x38] sm:$0xf]
      %v302 = vld [vmem:[%s205 + $0x3c] sm:$0xf]
      %v303 = vld [vmem:[%s205 + $0x40] sm:$0xf]
      %v304 = vld [vmem:[%s205 + $0x44] sm:$0xf]
      %v305 = vld [vmem:[%s205 + $0x48] sm:$0xf]
      %v306 = vld [vmem:[%s205 + $0x4c] sm:$0xf]
      %v307 = vld [vmem:[%s205 + $0x50] sm:$0xf]
      %v308 = vld [vmem:[%s205 + $0x54] sm:$0xf]
      %v309 = vld [vmem:[%s205 + $0x58] sm:$0xf]
      %v310 = vld [vmem:[%s205 + $0x5c] sm:$0xf]
      %v311 = vld [vmem:[%s205 + $0x60] sm:$0xf]
      %v312 = vld [vmem:[%s205 + $0x64] sm:$0xf]
      %v313 = vld [vmem:[%s205 + $0x68] sm:$0xf]
      %v314 = vld [vmem:[%s205 + $0x6c] sm:$0xf]
      %v315 = vld [vmem:[%s205 + $0x70] sm:$0xf]
      %v316 = vld [vmem:[%s205 + $0x74] sm:$0xf]
      %v317 = vld [vmem:[%s205 + $0x78] sm:$0xf]
      %v318 = vld [vmem:[%s205 + $0x7c] sm:$0xf]
      %v319 = vld [vmem:[%s211] sm:$0xf]
      %v320 = vld [vmem:[%s211 + $0x4] sm:$0xf]
      %v321 = vld [vmem:[%s211 + $0x8] sm:$0xf]
      %v322 = vld [vmem:[%s211 + $0xc] sm:$0xf]
      %v323 = vld [vmem:[%s211 + $0x10] sm:$0xf]
      %v324 = vld [vmem:[%s211 + $0x14] sm:$0xf]
      %v325 = vld [vmem:[%s211 + $0x18] sm:$0xf]
      %v326 = vld [vmem:[%s211 + $0x1c] sm:$0xf]
      %v327 = vld [vmem:[%s211 + $0x20] sm:$0xf]
      %v328 = vld [vmem:[%s211 + $0x24] sm:$0xf]
      %v329 = vld [vmem:[%s211 + $0x28] sm:$0xf]
      %v330 = vld [vmem:[%s211 + $0x2c] sm:$0xf]
      %v331 = vld [vmem:[%s211 + $0x30] sm:$0xf]
      %v332 = vld [vmem:[%s211 + $0x34] sm:$0xf]
      %v333 = vld [vmem:[%s211 + $0x38] sm:$0xf]
      %v334 = vld [vmem:[%s211 + $0x3c] sm:$0xf]
      %v367 = vunpack.c.l.b16 %v287
      %v368 = vunpack.c.l.b16 %v288
      %v369 = vunpack.c.l.b16 %v289
      %v370 = vunpack.c.l.b16 %v290
      %v371 = vunpack.c.l.b16 %v291
      %v372 = vunpack.c.l.b16 %v292
      %v373 = vunpack.c.l.b16 %v293
      %v374 = vunpack.c.l.b16 %v294
      %v375 = vunpack.c.l.b16 %v295
      %v376 = vunpack.c.l.b16 %v296
      %v377 = vunpack.c.l.b16 %v297
      %v378 = vunpack.c.l.b16 %v298
      %v379 = vunpack.c.l.b16 %v299
      %v380 = vunpack.c.l.b16 %v300
      %v381 = vunpack.c.l.b16 %v301
      %v382 = vunpack.c.l.b16 %v302
      %v383 = vunpack.c.l.b16 %v303
      %v384 = vunpack.c.l.b16 %v304
      %v385 = vunpack.c.l.b16 %v305
      %v386 = vunpack.c.l.b16 %v306
      %v387 = vunpack.c.l.b16 %v307
      %v388 = vunpack.c.l.b16 %v308
      %v389 = vunpack.c.l.b16 %v309
      %v390 = vunpack.c.l.b16 %v310
      %v391 = vunpack.c.l.b16 %v311
      %v392 = vunpack.c.l.b16 %v312
      %v393 = vunpack.c.l.b16 %v313
      %v394 = vunpack.c.l.b16 %v314
      %v395 = vunpack.c.l.b16 %v315
      %v396 = vunpack.c.l.b16 %v316
      %v397 = vunpack.c.l.b16 %v317
      %v398 = vunpack.c.l.b16 %v318
      %v399 = vpack.c.b16 %v368, %v367
      %v400 = vpack.c.b16 %v370, %v369
      %v401 = vpack.c.b16 %v372, %v371
      %v402 = vpack.c.b16 %v374, %v373
      %v403 = vpack.c.b16 %v376, %v375
      %v404 = vpack.c.b16 %v378, %v377
      %v405 = vpack.c.b16 %v380, %v379
      %v406 = vpack.c.b16 %v382, %v381
      %v407 = vpack.c.b16 %v384, %v383
      %v408 = vpack.c.b16 %v386, %v385
      %v409 = vpack.c.b16 %v388, %v387
      %v410 = vpack.c.b16 %v390, %v389
      %v411 = vpack.c.b16 %v392, %v391
      %v412 = vpack.c.b16 %v394, %v393
      %v413 = vpack.c.b16 %v396, %v395
      %v414 = vpack.c.b16 %v398, %v397
      %v447 = vunpack.c.l.b16 %v319
      %v448 = vunpack.c.l.b16 %v320
      %v449 = vunpack.c.l.b16 %v321
      %v450 = vunpack.c.l.b16 %v322
      %v451 = vunpack.c.l.b16 %v323
      %v452 = vunpack.c.l.b16 %v324
      %v453 = vunpack.c.l.b16 %v325
      %v454 = vunpack.c.l.b16 %v326
      %v455 = vunpack.c.l.b16 %v327
      %v456 = vunpack.c.l.b16 %v328
      %v457 = vunpack.c.l.b16 %v329
      %v458 = vunpack.c.l.b16 %v330
      %v459 = vunpack.c.l.b16 %v331
      %v460 = vunpack.c.l.b16 %v332
      %v461 = vunpack.c.l.b16 %v333
      %v462 = vunpack.c.l.b16 %v334
      %v463 = vpack.c.b16 %v448, %v447
      %v464 = vpack.c.b16 %v450, %v449
      %v465 = vpack.c.b16 %v452, %v451
      %v466 = vpack.c.b16 %v454, %v453
      %v467 = vpack.c.b16 %v456, %v455
      %v468 = vpack.c.b16 %v458, %v457
      %v469 = vpack.c.b16 %v460, %v459
      %v470 = vpack.c.b16 %v462, %v461
      %479 = vmatpush.bf16.msra.mxu0 %v470
      %480 = vmatpush.bf16.msra.mxu0 %v469
      %481 = vmatpush.bf16.msra.mxu0 %v468
      %482 = vmatpush.bf16.msra.mxu0 %v467
      %483 = vmatpush.bf16.msra.mxu0 %v466
      %484 = vmatpush.bf16.msra.mxu0 %v465
      %485 = vmatpush.bf16.msra.mxu0 %v464
      %486 = vmatpush.bf16.msra.mxu0 %v463
      %487 = vmatmul.bf16.gmra.mxu0 %v399
      %v488 = vpop.f32.mrf.mxu0
      %v489 = vadd.f32 0.0, %v488
      %v490 = vpop.f32.mrf.mxu0
      %v491 = vadd.f32 0.0, %v490
      %492 = vmatmul.bf16.gmra.mxu0 %v400
      %v493 = vpop.f32.mrf.mxu0
      %v494 = vadd.f32 0.0, %v493
      %v495 = vpop.f32.mrf.mxu0
      %v496 = vadd.f32 0.0, %v495
      %497 = vmatmul.bf16.gmra.mxu0 %v401
      %v498 = vpop.f32.mrf.mxu0
      %v499 = vadd.f32 0.0, %v498
      %v500 = vpop.f32.mrf.mxu0
      %v501 = vadd.f32 0.0, %v500
      %502 = vmatmul.bf16.gmra.mxu0 %v402
      %v503 = vpop.f32.mrf.mxu0
      %v504 = vadd.f32 0.0, %v503
      %v505 = vpop.f32.mrf.mxu0
      %v506 = vadd.f32 0.0, %v505
      %507 = vmatmul.bf16.gmra.mxu0 %v403
      %v508 = vpop.f32.mrf.mxu0
      %v509 = vadd.f32 0.0, %v508
      %v510 = vpop.f32.mrf.mxu0
      %v511 = vadd.f32 0.0, %v510
      %512 = vmatmul.bf16.gmra.mxu0 %v404
      %v513 = vpop.f32.mrf.mxu0
      %v514 = vadd.f32 0.0, %v513
      %v515 = vpop.f32.mrf.mxu0
      %v516 = vadd.f32 0.0, %v515
      %517 = vmatmul.bf16.gmra.mxu0 %v405
      %v518 = vpop.f32.mrf.mxu0
      %v519 = vadd.f32 0.0, %v518
      %v520 = vpop.f32.mrf.mxu0
      %v521 = vadd.f32 0.0, %v520
      %522 = vmatmul.bf16.gmra.mxu0 %v406
      %v523 = vpop.f32.mrf.mxu0
      %v524 = vadd.f32 0.0, %v523
      %v525 = vpop.f32.mrf.mxu0
      %v526 = vadd.f32 0.0, %v525
      %527 = vmatmul.bf16.gmra.mxu0 %v407
      %v528 = vpop.f32.mrf.mxu0
      %v529 = vadd.f32 0.0, %v528
      %v530 = vpop.f32.mrf.mxu0
      %v531 = vadd.f32 0.0, %v530
      %532 = vmatmul.bf16.gmra.mxu0 %v408
      %v533 = vpop.f32.mrf.mxu0
      %v534 = vadd.f32 0.0, %v533
      %v535 = vpop.f32.mrf.mxu0
      %v536 = vadd.f32 0.0, %v535
      %537 = vmatmul.bf16.gmra.mxu0 %v409
      %v538 = vpop.f32.mrf.mxu0
      %v539 = vadd.f32 0.0, %v538
      %v540 = vpop.f32.mrf.mxu0
      %v541 = vadd.f32 0.0, %v540
      %542 = vmatmul.bf16.gmra.mxu0 %v410
      %v543 = vpop.f32.mrf.mxu0
      %v544 = vadd.f32 0.0, %v543
      %v545 = vpop.f32.mrf.mxu0
      %v546 = vadd.f32 0.0, %v545
      %547 = vmatmul.bf16.gmra.mxu0 %v411
      %v548 = vpop.f32.mrf.mxu0
      %v549 = vadd.f32 0.0, %v548
      %v550 = vpop.f32.mrf.mxu0
      %v551 = vadd.f32 0.0, %v550
      %552 = vmatmul.bf16.gmra.mxu0 %v412
      %v553 = vpop.f32.mrf.mxu0
      %v554 = vadd.f32 0.0, %v553
      %v555 = vpop.f32.mrf.mxu0
      %v556 = vadd.f32 0.0, %v555
      %557 = vmatmul.bf16.gmra.mxu0 %v413
      %v558 = vpop.f32.mrf.mxu0
      %v559 = vadd.f32 0.0, %v558
      %v560 = vpop.f32.mrf.mxu0
      %v561 = vadd.f32 0.0, %v560
      %562 = vmatmul.bf16.gmra.mxu0 %v414
      %v563 = vpop.f32.mrf.mxu0
      %v564 = vadd.f32 0.0, %v563
      %v565 = vpop.f32.mrf.mxu0
      %v566 = vadd.f32 0.0, %v565
      %567 = vdwg.mxu0
      %v568 = vadd.f32 %v255, %v489
      %v569 = vadd.f32 %v256, %v491
      %v570 = vadd.f32 %v257, %v494
      %v571 = vadd.f32 %v258, %v496
      %v572 = vadd.f32 %v259, %v499
      %v573 = vadd.f32 %v260, %v501
      %v574 = vadd.f32 %v261, %v504
      %v575 = vadd.f32 %v262, %v506
      %v576 = vadd.f32 %v263, %v509
      %v577 = vadd.f32 %v264, %v511
      %v578 = vadd.f32 %v265, %v514
      %v579 = vadd.f32 %v266, %v516
      %v580 = vadd.f32 %v267, %v519
      %v581 = vadd.f32 %v268, %v521
      %v582 = vadd.f32 %v269, %v524
      %v583 = vadd.f32 %v270, %v526
      %v584 = vadd.f32 %v271, %v529
      %v585 = vadd.f32 %v272, %v531
      %v586 = vadd.f32 %v273, %v534
      %v587 = vadd.f32 %v274, %v536
      %v588 = vadd.f32 %v275, %v539
      %v589 = vadd.f32 %v276, %v541
      %v590 = vadd.f32 %v277, %v544
      %v591 = vadd.f32 %v278, %v546
      %v592 = vadd.f32 %v279, %v549
      %v593 = vadd.f32 %v280, %v551
      %v594 = vadd.f32 %v281, %v554
      %v595 = vadd.f32 %v282, %v556
      %v596 = vadd.f32 %v283, %v559
      %v597 = vadd.f32 %v284, %v561
      %v598 = vadd.f32 %v285, %v564
      %v599 = vadd.f32 %v286, %v566
      %600 = vst [vmem:[#allocation2] sm:$0xff] %v568
      %601 = vst [vmem:[#allocation2 + $0x8] sm:$0xff] %v569
      %602 = vst [vmem:[#allocation2 + $0x10] sm:$0xff] %v570
      %603 = vst [vmem:[#allocation2 + $0x18] sm:$0xff] %v571
      %604 = vst [vmem:[#allocation2 + $0x20] sm:$0xff] %v572
      %605 = vst [vmem:[#allocation2 + $0x28] sm:$0xff] %v573
      %606 = vst [vmem:[#allocation2 + $0x30] sm:$0xff] %v574
      %607 = vst [vmem:[#allocation2 + $0x38] sm:$0xff] %v575
      %608 = vst [vmem:[#allocation2 + $0x40] sm:$0xff] %v576
      %609 = vst [vmem:[#allocation2 + $0x48] sm:$0xff] %v577
      %610 = vst [vmem:[#allocation2 + $0x50] sm:$0xff] %v578
      %611 = vst [vmem:[#allocation2 + $0x58] sm:$0xff] %v579
      %612 = vst [vmem:[#allocation2 + $0x60] sm:$0xff] %v580
      %613 = vst [vmem:[#allocation2 + $0x68] sm:$0xff] %v581
      %614 = vst [vmem:[#allocation2 + $0x70] sm:$0xff] %v582
      %615 = vst [vmem:[#allocation2 + $0x78] sm:$0xff] %v583
      %616 = vst [vmem:[#allocation2 + $0x80] sm:$0xff] %v584
      %617 = vst [vmem:[#allocation2 + $0x88] sm:$0xff] %v585
      %618 = vst [vmem:[#allocation2 + $0x90] sm:$0xff] %v586
      %619 = vst [vmem:[#allocation2 + $0x98] sm:$0xff] %v587
      %620 = vst [vmem:[#allocation2 + $0xa0] sm:$0xff] %v588
      %621 = vst [vmem:[#allocation2 + $0xa8] sm:$0xff] %v589
      %622 = vst [vmem:[#allocation2 + $0xb0] sm:$0xff] %v590
      %623 = vst [vmem:[#allocation2 + $0xb8] sm:$0xff] %v591
      %624 = vst [vmem:[#allocation2 + $0xc0] sm:$0xff] %v592
      %625 = vst [vmem:[#allocation2 + $0xc8] sm:$0xff] %v593
      %626 = vst [vmem:[#allocation2 + $0xd0] sm:$0xff] %v594
      %627 = vst [vmem:[#allocation2 + $0xd8] sm:$0xff] %v595
      %628 = vst [vmem:[#allocation2 + $0xe0] sm:$0xff] %v596
      %629 = vst [vmem:[#allocation2 + $0xe8] sm:$0xff] %v597
      %630 = vst [vmem:[#allocation2 + $0xf0] sm:$0xff] %v598
      %631 = vst [vmem:[#allocation2 + $0xf8] sm:$0xff] %v599
      // Predicated region
      $region37: #{graph_convolution.2} parent=31 // pred_check
        %p632 = pneg %p219
      $region38: #{graph_convolution.2} parent=31 // pred_check_branch
        %634 = sbr.rel (%p632) target = $region40
      $region39: #{graph_convolution.2} parent=31 // pred_region
        %v635 = vld [vmem:[#allocation2] sm:$0xff]
        %v636 = vld [vmem:[#allocation2 + $0x8] sm:$0xff]
        %v637 = vld [vmem:[#allocation2 + $0x10] sm:$0xff]
        %v638 = vld [vmem:[#allocation2 + $0x18] sm:$0xff]
        %v639 = vld [vmem:[#allocation2 + $0x20] sm:$0xff]
        %v640 = vld [vmem:[#allocation2 + $0x28] sm:$0xff]
        %v641 = vld [vmem:[#allocation2 + $0x30] sm:$0xff]
        %v642 = vld [vmem:[#allocation2 + $0x38] sm:$0xff]
        %v643 = vld [vmem:[#allocation2 + $0x40] sm:$0xff]
        %v644 = vld [vmem:[#allocation2 + $0x48] sm:$0xff]
        %v645 = vld [vmem:[#allocation2 + $0x50] sm:$0xff]
        %v646 = vld [vmem:[#allocation2 + $0x58] sm:$0xff]
        %v647 = vld [vmem:[#allocation2 + $0x60] sm:$0xff]
        %v648 = vld [vmem:[#allocation2 + $0x68] sm:$0xff]
        %v649 = vld [vmem:[#allocation2 + $0x70] sm:$0xff]
        %v650 = vld [vmem:[#allocation2 + $0x78] sm:$0xff]
        %v651 = vld [vmem:[#allocation2 + $0x80] sm:$0xff]
        %v652 = vld [vmem:[#allocation2 + $0x88] sm:$0xff]
        %v653 = vld [vmem:[#allocation2 + $0x90] sm:$0xff]
        %v654 = vld [vmem:[#allocation2 + $0x98] sm:$0xff]
        %v655 = vld [vmem:[#allocation2 + $0xa0] sm:$0xff]
        %v656 = vld [vmem:[#allocation2 + $0xa8] sm:$0xff]
        %v657 = vld [vmem:[#allocation2 + $0xb0] sm:$0xff]
        %v658 = vld [vmem:[#allocation2 + $0xb8] sm:$0xff]
        %v659 = vld [vmem:[#allocation2 + $0xc0] sm:$0xff]
        %v660 = vld [vmem:[#allocation2 + $0xc8] sm:$0xff]
        %v661 = vld [vmem:[#allocation2 + $0xd0] sm:$0xff]
        %v662 = vld [vmem:[#allocation2 + $0xd8] sm:$0xff]
        %v663 = vld [vmem:[#allocation2 + $0xe0] sm:$0xff]
        %v664 = vld [vmem:[#allocation2 + $0xe8] sm:$0xff]
        %v665 = vld [vmem:[#allocation2 + $0xf0] sm:$0xff]
        %v666 = vld [vmem:[#allocation2 + $0xf8] sm:$0xff]
        %v667 = vld [vmem:[%s2] sm:$0x1]
        %v669 = vperm.slane %v667, 0
        %v671 = vadd.f32 %v635, %v669
        %v672 = vadd.f32 %v636, %v669
        %v673 = vadd.f32 %v637, %v669
        %v674 = vadd.f32 %v638, %v669
        %v675 = vadd.f32 %v639, %v669
        %v676 = vadd.f32 %v640, %v669
        %v677 = vadd.f32 %v641, %v669
        %v678 = vadd.f32 %v642, %v669
        %v679 = vadd.f32 %v643, %v669
        %v680 = vadd.f32 %v644, %v669
        %v681 = vadd.f32 %v645, %v669
        %v682 = vadd.f32 %v646, %v669
        %v683 = vadd.f32 %v647, %v669
        %v684 = vadd.f32 %v648, %v669
        %v685 = vadd.f32 %v649, %v669
        %v686 = vadd.f32 %v650, %v669
        %v687 = vadd.f32 %v651, %v669
        %v688 = vadd.f32 %v652, %v669
        %v689 = vadd.f32 %v653, %v669
        %v690 = vadd.f32 %v654, %v669
        %v691 = vadd.f32 %v655, %v669
        %v692 = vadd.f32 %v656, %v669
        %v693 = vadd.f32 %v657, %v669
        %v694 = vadd.f32 %v658, %v669
        %v695 = vadd.f32 %v659, %v669
        %v696 = vadd.f32 %v660, %v669
        %v697 = vadd.f32 %v661, %v669
        %v698 = vadd.f32 %v662, %v669
        %v699 = vadd.f32 %v663, %v669
        %v700 = vadd.f32 %v664, %v669
        %v701 = vadd.f32 %v665, %v669
        %v702 = vadd.f32 %v666, %v669
        %v703 = vpack.c.bf16 %v671, %v671
        %v704 = vpack.c.bf16 %v672, %v672
        %v705 = vpack.c.bf16 %v673, %v673
        %v706 = vpack.c.bf16 %v674, %v674
        %v707 = vpack.c.bf16 %v675, %v675
        %v708 = vpack.c.bf16 %v676, %v676
        %v709 = vpack.c.bf16 %v677, %v677
        %v710 = vpack.c.bf16 %v678, %v678
        %v711 = vpack.c.bf16 %v679, %v679
        %v712 = vpack.c.bf16 %v680, %v680
        %v713 = vpack.c.bf16 %v681, %v681
        %v714 = vpack.c.bf16 %v682, %v682
        %v715 = vpack.c.bf16 %v683, %v683
        %v716 = vpack.c.bf16 %v684, %v684
        %v717 = vpack.c.bf16 %v685, %v685
        %v718 = vpack.c.bf16 %v686, %v686
        %v719 = vpack.c.bf16 %v687, %v687
        %v720 = vpack.c.bf16 %v688, %v688
        %v721 = vpack.c.bf16 %v689, %v689
        %v722 = vpack.c.bf16 %v690, %v690
        %v723 = vpack.c.bf16 %v691, %v691
        %v724 = vpack.c.bf16 %v692, %v692
        %v725 = vpack.c.bf16 %v693, %v693
        %v726 = vpack.c.bf16 %v694, %v694
        %v727 = vpack.c.bf16 %v695, %v695
        %v728 = vpack.c.bf16 %v696, %v696
        %v729 = vpack.c.bf16 %v697, %v697
        %v730 = vpack.c.bf16 %v698, %v698
        %v731 = vpack.c.bf16 %v699, %v699
        %v732 = vpack.c.bf16 %v700, %v700
        %v733 = vpack.c.bf16 %v701, %v701
        %v734 = vpack.c.bf16 %v702, %v702
        %735 = vst [vmem:[%s217] sm:$0xf] %v703
        %736 = vst [vmem:[%s217 + $0x4] sm:$0xf] %v704
        %737 = vst [vmem:[%s217 + $0x8] sm:$0xf] %v705
        %738 = vst [vmem:[%s217 + $0xc] sm:$0xf] %v706
        %739 = vst [vmem:[%s217 + $0x10] sm:$0xf] %v707
        %740 = vst [vmem:[%s217 + $0x14] sm:$0xf] %v708
        %741 = vst [vmem:[%s217 + $0x18] sm:$0xf] %v709
        %742 = vst [vmem:[%s217 + $0x1c] sm:$0xf] %v710
        %743 = vst [vmem:[%s217 + $0x20] sm:$0xf] %v711
        %744 = vst [vmem:[%s217 + $0x24] sm:$0xf] %v712
        %745 = vst [vmem:[%s217 + $0x28] sm:$0xf] %v713
        %746 = vst [vmem:[%s217 + $0x2c] sm:$0xf] %v714
        %747 = vst [vmem:[%s217 + $0x30] sm:$0xf] %v715
        %748 = vst [vmem:[%s217 + $0x34] sm:$0xf] %v716
        %749 = vst [vmem:[%s217 + $0x38] sm:$0xf] %v717
        %750 = vst [vmem:[%s217 + $0x3c] sm:$0xf] %v718
        %751 = vst [vmem:[%s217 + $0x40] sm:$0xf] %v719
        %752 = vst [vmem:[%s217 + $0x44] sm:$0xf] %v720
        %753 = vst [vmem:[%s217 + $0x48] sm:$0xf] %v721
        %754 = vst [vmem:[%s217 + $0x4c] sm:$0xf] %v722
        %755 = vst [vmem:[%s217 + $0x50] sm:$0xf] %v723
        %756 = vst [vmem:[%s217 + $0x54] sm:$0xf] %v724
        %757 = vst [vmem:[%s217 + $0x58] sm:$0xf] %v725
        %758 = vst [vmem:[%s217 + $0x5c] sm:$0xf] %v726
        %759 = vst [vmem:[%s217 + $0x60] sm:$0xf] %v727
        %760 = vst [vmem:[%s217 + $0x64] sm:$0xf] %v728
        %761 = vst [vmem:[%s217 + $0x68] sm:$0xf] %v729
        %762 = vst [vmem:[%s217 + $0x6c] sm:$0xf] %v730
        %763 = vst [vmem:[%s217 + $0x70] sm:$0xf] %v731
        %764 = vst [vmem:[%s217 + $0x74] sm:$0xf] %v732
        %765 = vst [vmem:[%s217 + $0x78] sm:$0xf] %v733
        %766 = vst [vmem:[%s217 + $0x7c] sm:$0xf] %v734
      $region40: #{graph_convolution.2} parent=31 // pred_fallthru
        _
      %s767 = smul.u32 32, %s18
      %p768 = scmp.lt.s32.totalorder %s767, 63
      %s769 = scalar_select %p768, %s767, 63
      %s770 = smul.addr %s769, 4
      %s771 = scalar_lea.vmem %s3, %s770
      // Predicated region
      $region41: #{graph_convolution.2} parent=31 // pred_check
        %p772 = pneg %p119
      $region42: #{graph_convolution.2} parent=31 // pred_check_branch
        %774 = sbr.rel (%p772) target = $region44
      $region43: #{graph_convolution.2} parent=31 // pred_region
        %s775 = smul.u32 32, %s18
      $region44: #{graph_convolution.2} parent=31 // pred_fallthru
        _
    $region32: #{graph_convolution.2} parent=5 // pred_fallthru
      _
    %p776 = scmp.le.s32.totalorder 2, %s9
    // Predicated region
    $region45: #{graph_convolution.2} parent=5 // pred_check
      %p777 = pneg %p776
    $region46: #{graph_convolution.2} parent=5 // pred_check_branch
      %779 = sbr.rel (%p777) target = $region48
    $region47: #{graph_convolution.2} parent=5 // pred_region
      %s780 = ssub.s32 %s9, 2
      // Predicated region
      $region49: #{graph_convolution.2} parent=47 // pred_check
        %p781 = pneg %p125
      $region50: #{graph_convolution.2} parent=47 // pred_check_branch
        %783 = sbr.rel (%p781) target = $region52
      $region51: #{graph_convolution.2} parent=47 // pred_region
        %s784 = smul.u32 32, %s20
        %p785 = scmp.lt.s32.totalorder %s784, 63
        %s786 = scalar_select %p785, %s784, 63
        %s787 = smul.addr %s786, 4
        %s788 = scalar_lea.vmem %s3, %s787
      $region52: #{graph_convolution.2} parent=47 // pred_fallthru
        _
    $region48: #{graph_convolution.2} parent=5 // pred_fallthru
      _
  $region6: #{graph_convolution.2} parent=0 // loop_footer
    %s13 = sadd.s32 1, %s9
  $region7: #{graph_convolution.2} parent=0 // loop_footer_branch
    %8 = sbr.rel target = $region3
  $region8: #{graph_convolution.2} parent=0 // loop_exit
    _

// kernel: graph_convolution.3
$region0: #{graph_convolution.3}
  #allocation0 [shape = 'u32[]', space=smem, size = 0x4, offset = 0x4, fixed_abs, tag = 'smem constant byte address 0x4 - core index']
  #allocation1 [shape = 'u32[72,128]{1,0:T(1,128)}', space=vmem, size = 0x9000, scoped, tag = 'internal scratch']
  #allocation2 [shape = 'f32[256,128]{1,0:T(8,128)}', space=vmem, size = 0x20000, scoped, tag = 'scratch operand']
  %s0 = inlined_call_operand.vmem [shape: bf16[512,512], index: 0, kind: input, shape index: {}]
  %s1 = inlined_call_operand.vmem [shape: bf16[512,128], index: 1, kind: input, shape index: {}]
  %s2 = inlined_call_operand.vmem [shape: f32[512,128], index: 2, kind: output, shape index: {}]
  %s3 = sld [smem:[#allocation0]]
  $region87: #{graph_convolution.3} parent=0
    _
  %s5 = ssub.s32 1, %s3
  %s6 = scalar_select 0, %s5, %s3
  $region1: #{graph_convolution.3} parent=0
    #allocation3 [shape = 'u8[262144]{0}', space=vmem, size = 0x40000, scoped, tag = 'input window, operand 0']
    loop: start=0, step=1, limit=6
    $region2: #{graph_convolution.3} parent=1 // loop_pre_header
      _
    $region3: #{graph_convolution.3} parent=1 // loop_header
      %s8 = sphi 0, %s12
      %p9 = scmp.ge.s32.totalorder %s8, 6
      %s15 = sphi 0, %s27
      %s16 = sphi 0, %s23
      %s17 = sphi 0, %s15
      %s18 = sphi 0, %s16
      %s19 = sphi 0, %s17
      %s20 = sphi 0, %s18
      %s32 = sphi 0, %s34
      %s35 = sphi 0, %s32
      %s36 = sphi 0, %s35
      %s52 = sphi 0, %s36
      %s56 = sphi 0, %s56
      %s58 = sphi 0, %s56
      %s59 = sphi 0, %s58
      %s73 = sphi 0, %s59
      %s79 = sphi 0, %s81
      %s82 = sphi 0, %s79
      %s83 = sphi 0, %s82
      %s99 = sphi 0, %s83
    $region4: #{graph_convolution.3} parent=1 // loop_header_branch
      %11 = sbr.rel (%p9) target = $region8
    $region5: #{graph_convolution.3} parent=1 // loop_body
      %s13 = ssub.s32 %s8, 1
      %s14 = ssub.s32 %s8, 2
      %s21 = sadd.s32 1, %s16
      %p22 = scmp.ge.s32.totalorder %s21, 2
      %s23 = scalar_select %p22, 0, %s21
      %s24 = sadd.s32 1, %s15
      %s25 = scalar_select %p22, %s24, %s15
      %p26 = scmp.ge.s32.totalorder %s25, 2
      %s27 = scalar_select %p26, 0, %s25
      %s28 = ssub.s32 %s15, %s27
      %s29 = ssub.s32 %s16, %s23
      %s30 = sor.u32 %s28, %s29
      %p31 = scmp.eq.s32.totalorder %s30, 0
      %s33 = sadd.s32 %s32, 1
      %s34 = scalar_select %p31, %s32, %s33
      %p37 = pneg %p31
      %p38 = scmp.eq.s32.totalorder %s8, 3
      %p39 = por %p37, %p38
      %p40 = scmp.ne.s32.totalorder %s32, %s35
      %p41 = scmp.eq.s32.totalorder %s8, 0
      %p42 = por %p40, %p41
      %p43 = scmp.ne.s32.totalorder %s32, %s35
      %p44 = scmp.eq.s32.totalorder %s13, 3
      %p45 = por %p43, %p44
      %p46 = scmp.ne.s32.totalorder %s35, %s36
      %p47 = scmp.eq.s32.totalorder %s13, 0
      %p48 = por %p46, %p47
      %p49 = scmp.ne.s32.totalorder %s35, %s36
      %p50 = scmp.eq.s32.totalorder %s14, 3
      %p51 = por %p49, %p50
      %p53 = scmp.ne.s32.totalorder %s36, %s52
      %p54 = scmp.eq.s32.totalorder %s14, 0
      %p55 = por %p53, %p54
      %s57 = sadd.s32 %s56, 1
      %p60 = scmp.eq.s32.totalorder %s8, 3
      %p61 = scmp.ne.s32.totalorder %s56, %s58
      %p62 = scmp.eq.s32.totalorder %s8, 0
      %p63 = por %p61, %p62
      %p64 = scmp.ne.s32.totalorder %s56, %s58
      %p65 = scmp.eq.s32.totalorder %s13, 3
      %p66 = por %p64, %p65
      %p67 = scmp.ne.s32.totalorder %s58, %s59
      %p68 = scmp.eq.s32.totalorder %s13, 0
      %p69 = por %p67, %p68
      %p70 = scmp.ne.s32.totalorder %s58, %s59
      %p71 = scmp.eq.s32.totalorder %s14, 3
      %p72 = por %p70, %p71
      %p74 = scmp.ne.s32.totalorder %s59, %s73
      %p75 = scmp.eq.s32.totalorder %s14, 0
      %p76 = por %p74, %p75
      %s77 = ssub.s32 %s15, %s27
      %p78 = scmp.eq.s32.totalorder %s77, 0
      %s80 = sadd.s32 %s79, 1
      %s81 = scalar_select %p78, %s79, %s80
      %p84 = pneg %p78
      %p85 = scmp.eq.s32.totalorder %s8, 3
      %p86 = por %p84, %p85
      %p87 = scmp.ne.s32.totalorder %s79, %s82
      %p88 = scmp.eq.s32.totalorder %s8, 0
      %p89 = por %p87, %p88
      %p90 = scmp.ne.s32.totalorder %s79, %s82
      %p91 = scmp.eq.s32.totalorder %s13, 3
      %p92 = por %p90, %p91
      %p93 = scmp.ne.s32.totalorder %s82, %s83
      %p94 = scmp.eq.s32.totalorder %s13, 0
      %p95 = por %p93, %p94
      %p96 = scmp.ne.s32.totalorder %s82, %s83
      %p97 = scmp.eq.s32.totalorder %s14, 3
      %p98 = por %p96, %p97
      %p100 = scmp.ne.s32.totalorder %s83, %s99
      %p101 = scmp.eq.s32.totalorder %s14, 0
      %p102 = por %p100, %p101
      %p103 = scmp.le.s32.totalorder 1, %s8
      %p104 = scmp.lt.s32.totalorder %s8, 5
      %p105 = pnand %p103, %p104
      %p106 = pneg %p105
      // Predicated region
      $region9: #{graph_convolution.3} parent=5 // pred_check
        _
      $region10: #{graph_convolution.3} parent=5 // pred_check_branch
        %108 = sbr.rel (%p105) target = $region12
      $region11: #{graph_convolution.3} parent=5 // pred_region
        %s109 = ssub.s32 %s8, 1
        // Predicated region
        $region13: #{graph_convolution.3} parent=11 // pred_check
          %p110 = pneg %p69
        $region14: #{graph_convolution.3} parent=11 // pred_check_branch
          %112 = sbr.rel (%p110) target = $region16
        $region15: #{graph_convolution.3} parent=11 // pred_region
          _
        $region16: #{graph_convolution.3} parent=11 // pred_fallthru
          _
      $region12: #{graph_convolution.3} parent=5 // pred_fallthru
        _
      %p113 = scmp.lt.s32.totalorder %s8, 4
      // Predicated region
      $region17: #{graph_convolution.3} parent=5 // pred_check
        %p114 = pneg %p113
      $region18: #{graph_convolution.3} parent=5 // pred_check_branch
        %116 = sbr.rel (%p114) target = $region20
      $region19: #{graph_convolution.3} parent=5 // pred_region
        // Predicated region
        $region21: #{graph_convolution.3} parent=19 // pred_check
          %p117 = pneg %p42
        $region22: #{graph_convolution.3} parent=19 // pred_check_branch
          %119 = sbr.rel (%p117) target = $region24
        $region23: #{graph_convolution.3} parent=19 // pred_region
          %s120 = sand.u32 %s32, 1
          %s121 = sand.u32 %s32, 1
          %s122 = smul.addr %s121, 256
          %s123 = scalar_lea.vmem [#allocation3], %s122
          %s124 = smul.u32 32, %s15
          %s125 = smul.u32 2, %s16
          %s126 = smul.addr %s124, 4
          %s127 = sadd.s32 %s125, %s126
          %s128 = smul.addr %s127, 4
          %s129 = scalar_lea.vmem %s0, %s128
          // Predicated region
          $region25: #{graph_convolution.3} parent=23 // pred_check
            _
          $region26: #{graph_convolution.3} parent=23 // pred_check_branch
            %131 = sbr.rel (0) target = $region28
          $region27: #{graph_convolution.3} parent=23 // pred_region
            // Predicated region
            $region29: #{graph_convolution.3} parent=27 // pred_check
              _
            $region30: #{graph_convolution.3} parent=27 // pred_check_branch
              %133 = sbr.rel (0) target = $region32
            $region31: #{graph_convolution.3} parent=27 // pred_region
              // Predicated region
              $region44: #{graph_convolution.3} parent=31 // pred_check
                _
              $region45: #{graph_convolution.3} parent=31 // pred_check_branch
                %211 = sbr.rel (0) target = $region47
              $region46: #{graph_convolution.3} parent=31 // pred_region
                loop: start=0, step=1, limit=1
                $region48: #{graph_convolution.3} parent=46 // loop_pre_header
                  _
                $region49: #{graph_convolution.3} parent=46 // loop_header
                  %s213 = sphi 0, %s217
                  %p214 = scmp.ge.s32.totalorder %s213, 1
                  %s218 = sphi %s129, %s129
                  %s219 = sphi %s123, %s123
                $region50: #{graph_convolution.3} parent=46 // loop_header_branch
                  %216 = sbr.rel (%p214) target = $region54
                $region51: #{graph_convolution.3} parent=46 // loop_body
                  %v220 = vld [vmem:[%s218] sm:$0xff]
                  %221 = vst [vmem:[%s219] sm:$0xff] %v220
                  %v222 = vld [vmem:[%s218 + $0x10] sm:$0xff]
                  %223 = vst [vmem:[%s219 + $0x8] sm:$0xff] %v222
                  %v224 = vld [vmem:[%s218 + $0x20] sm:$0xff]
                  %225 = vst [vmem:[%s219 + $0x10] sm:$0xff] %v224
                  %v226 = vld [vmem:[%s218 + $0x30] sm:$0xff]
                  %227 = vst [vmem:[%s219 + $0x18] sm:$0xff] %v226
                  %v228 = vld [vmem:[%s218 + $0x40] sm:$0xff]
                  %229 = vst [vmem:[%s219 + $0x20] sm:$0xff] %v228
                  %v230 = vld [vmem:[%s218 + $0x50] sm:$0xff]
                  %231 = vst [vmem:[%s219 + $0x28] sm:$0xff] %v230
                  %v232 = vld [vmem:[%s218 + $0x60] sm:$0xff]
                  %233 = vst [vmem:[%s219 + $0x30] sm:$0xff] %v232
                  %v234 = vld [vmem:[%s218 + $0x70] sm:$0xff]
                  %235 = vst [vmem:[%s219 + $0x38] sm:$0xff] %v234
                  %v236 = vld [vmem:[%s218 + $0x80] sm:$0xff]
                  %237 = vst [vmem:[%s219 + $0x40] sm:$0xff] %v236
                  %v238 = vld [vmem:[%s218 + $0x90] sm:$0xff]
                  %239 = vst [vmem:[%s219 + $0x48] sm:$0xff] %v238
                  %v240 = vld [vmem:[%s218 + $0xa0] sm:$0xff]
                  %241 = vst [vmem:[%s219 + $0x50] sm:$0xff] %v240
                  %v242 = vld [vmem:[%s218 + $0xb0] sm:$0xff]
                  %243 = vst [vmem:[%s219 + $0x58] sm:$0xff] %v242
                  %v244 = vld [vmem:[%s218 + $0xc0] sm:$0xff]
                  %245 = vst [vmem:[%s219 + $0x60] sm:$0xff] %v244
                  %v246 = vld [vmem:[%s218 + $0xd0] sm:$0xff]
                  %247 = vst [vmem:[%s219 + $0x68] sm:$0xff] %v246
                  %v248 = vld [vmem:[%s218 + $0xe0] sm:$0xff]
                  %249 = vst [vmem:[%s219 + $0x70] sm:$0xff] %v248
                  %v250 = vld [vmem:[%s218 + $0xf0] sm:$0xff]
                  %251 = vst [vmem:[%s219 + $0x78] sm:$0xff] %v250
                  %v252 = vld [vmem:[%s218 + $0x100] sm:$0xff]
                  %253 = vst [vmem:[%s219 + $0x80] sm:$0xff] %v252
                  %v254 = vld [vmem:[%s218 + $0x110] sm:$0xff]
                  %255 = vst [vmem:[%s219 + $0x88] sm:$0xff] %v254
                  %v256 = vld [vmem:[%s218 + $0x120] sm:$0xff]
                  %257 = vst [vmem:[%s219 + $0x90] sm:$0xff] %v256
                  %v258 = vld [vmem:[%s218 + $0x130] sm:$0xff]
                  %259 = vst [vmem:[%s219 + $0x98] sm:$0xff] %v258
                  %v260 = vld [vmem:[%s218 + $0x140] sm:$0xff]
                  %261 = vst [vmem:[%s219 + $0xa0] sm:$0xff] %v260
                  %v262 = vld [vmem:[%s218 + $0x150] sm:$0xff]
                  %263 = vst [vmem:[%s219 + $0xa8] sm:$0xff] %v262
                  %v264 = vld [vmem:[%s218 + $0x160] sm:$0xff]
                  %265 = vst [vmem:[%s219 + $0xb0] sm:$0xff] %v264
                  %v266 = vld [vmem:[%s218 + $0x170] sm:$0xff]
                  %267 = vst [vmem:[%s219 + $0xb8] sm:$0xff] %v266
                  %v268 = vld [vmem:[%s218 + $0x180] sm:$0xff]
                  %269 = vst [vmem:[%s219 + $0xc0] sm:$0xff] %v268
                  %v270 = vld [vmem:[%s218 + $0x190] sm:$0xff]
                  %271 = vst [vmem:[%s219 + $0xc8] sm:$0xff] %v270
                  %v272 = vld [vmem:[%s218 + $0x1a0] sm:$0xff]
                  %273 = vst [vmem:[%s219 + $0xd0] sm:$0xff] %v272
                  %v274 = vld [vmem:[%s218 + $0x1b0] sm:$0xff]
                  %275 = vst [vmem:[%s219 + $0xd8] sm:$0xff] %v274
                  %v276 = vld [vmem:[%s218 + $0x1c0] sm:$0xff]
                  %277 = vst [vmem:[%s219 + $0xe0] sm:$0xff] %v276
                  %v278 = vld [vmem:[%s218 + $0x1d0] sm:$0xff]
                  %279 = vst [vmem:[%s219 + $0xe8] sm:$0xff] %v278
                  %v280 = vld [vmem:[%s218 + $0x1e0] sm:$0xff]
                  %281 = vst [vmem:[%s219 + $0xf0] sm:$0xff] %v280
                  %v282 = vld [vmem:[%s218 + $0x1f0] sm:$0xff]
                  %283 = vst [vmem:[%s219 + $0xf8] sm:$0xff] %v282
                $region52: #{graph_convolution.3} parent=46 // loop_footer
                  %s217 = sadd.s32 1, %s213
                $region53: #{graph_convolution.3} parent=46 // loop_footer_branch
                  %212 = sbr.rel target = $region49
                $region54: #{graph_convolution.3} parent=46 // loop_exit
                  _
              $region47: #{graph_convolution.3} parent=31 // pred_fallthru
                _
              // Predicated region
              $region55: #{graph_convolution.3} parent=31 // pred_check
                _
              $region56: #{graph_convolution.3} parent=31 // pred_check_branch
                %285 = sbr.rel target = $region58
              $region57: #{graph_convolution.3} parent=31 // pred_region
                _
              $region58: #{graph_convolution.3} parent=31 // pred_fallthru
                _
            $region32: #{graph_convolution.3} parent=27 // pred_fallthru
              _
            // Predicated region
            $region33: #{graph_convolution.3} parent=27 // pred_check
              _
            $region34: #{graph_convolution.3} parent=27 // pred_check_branch
              %135 = sbr.rel target = $region36
            $region35: #{graph_convolution.3} parent=27 // pred_region
              %s137 = ssub.s32 256, 1
              loop: start=0, step=1, limit=1
              $region37: #{graph_convolution.3} parent=35 // loop_pre_header
                _
              $region38: #{graph_convolution.3} parent=35 // loop_header
                %s139 = sphi 0, %s143
                %p140 = scmp.ge.s32.totalorder %s139, 1
                %s144 = sphi %s129, %s129
                %s145 = sphi %s123, %s123
              $region39: #{graph_convolution.3} parent=35 // loop_header_branch
                %142 = sbr.rel (%p140) target = $region43
              $region40: #{graph_convolution.3} parent=35 // loop_body
                %v146 = vld [vmem:[%s144] sm:%s137]
                %147 = vst [vmem:[%s145] sm:%s137] %v146
                %v148 = vld [vmem:[%s144 + $0x10] sm:%s137]
                %149 = vst [vmem:[%s145 + $0x8] sm:%s137] %v148
                %v150 = vld [vmem:[%s144 + $0x20] sm:%s137]
                %151 = vst [vmem:[%s145 + $0x10] sm:%s137] %v150
                %v152 = vld [vmem:[%s144 + $0x30] sm:%s137]
                %153 = vst [vmem:[%s145 + $0x18] sm:%s137] %v152
                %v154 = vld [vmem:[%s144 + $0x40] sm:%s137]
                %155 = vst [vmem:[%s145 + $0x20] sm:%s137] %v154
                %v156 = vld [vmem:[%s144 + $0x50] sm:%s137]
                %157 = vst [vmem:[%s145 + $0x28] sm:%s137] %v156
                %v158 = vld [vmem:[%s144 + $0x60] sm:%s137]
                %159 = vst [vmem:[%s145 + $0x30] sm:%s137] %v158
                %v160 = vld [vmem:[%s144 + $0x70] sm:%s137]
                %161 = vst [vmem:[%s145 + $0x38] sm:%s137] %v160
                %v162 = vld [vmem:[%s144 + $0x80] sm:%s137]
                %163 = vst [vmem:[%s145 + $0x40] sm:%s137] %v162
                %v164 = vld [vmem:[%s144 + $0x90] sm:%s137]
                %165 = vst [vmem:[%s145 + $0x48] sm:%s137] %v164
                %v166 = vld [vmem:[%s144 + $0xa0] sm:%s137]
                %167 = vst [vmem:[%s145 + $0x50] sm:%s137] %v166
                %v168 = vld [vmem:[%s144 + $0xb0] sm:%s137]
                %169 = vst [vmem:[%s145 + $0x58] sm:%s137] %v168
                %v170 = vld [vmem:[%s144 + $0xc0] sm:%s137]
                %171 = vst [vmem:[%s145 + $0x60] sm:%s137] %v170
                %v172 = vld [vmem:[%s144 + $0xd0] sm:%s137]
                %173 = vst [vmem:[%s145 + $0x68] sm:%s137] %v172
                %v174 = vld [vmem:[%s144 + $0xe0] sm:%s137]
                %175 = vst [vmem:[%s145 + $0x70] sm:%s137] %v174
                %v176 = vld [vmem:[%s144 + $0xf0] sm:%s137]
                %177 = vst [vmem:[%s145 + $0x78] sm:%s137] %v176
                %v178 = vld [vmem:[%s144 + $0x100] sm:%s137]
                %179 = vst [vmem:[%s145 + $0x80] sm:%s137] %v178
                %v180 = vld [vmem:[%s144 + $0x110] sm:%s137]
                %181 = vst [vmem:[%s145 + $0x88] sm:%s137] %v180
                %v182 = vld [vmem:[%s144 + $0x120] sm:%s137]
                %183 = vst [vmem:[%s145 + $0x90] sm:%s137] %v182
                %v184 = vld [vmem:[%s144 + $0x130] sm:%s137]
                %185 = vst [vmem:[%s145 + $0x98] sm:%s137] %v184
                %v186 = vld [vmem:[%s144 + $0x140] sm:%s137]
                %187 = vst [vmem:[%s145 + $0xa0] sm:%s137] %v186
                %v188 = vld [vmem:[%s144 + $0x150] sm:%s137]
                %189 = vst [vmem:[%s145 + $0xa8] sm:%s137] %v188
                %v190 = vld [vmem:[%s144 + $0x160] sm:%s137]
                %191 = vst [vmem:[%s145 + $0xb0] sm:%s137] %v190
                %v192 = vld [vmem:[%s144 + $0x170] sm:%s137]
                %193 = vst [vmem:[%s145 + $0xb8] sm:%s137] %v192
                %v194 = vld [vmem:[%s144 + $0x180] sm:%s137]
                %195 = vst [vmem:[%s145 + $0xc0] sm:%s137] %v194
                %v196 = vld [vmem:[%s144 + $0x190] sm:%s137]
                %197 = vst [vmem:[%s145 + $0xc8] sm:%s137] %v196
                %v198 = vld [vmem:[%s144 + $0x1a0] sm:%s137]
                %199 = vst [vmem:[%s145 + $0xd0] sm:%s137] %v198
                %v200 = vld [vmem:[%s144 + $0x1b0] sm:%s137]
                %201 = vst [vmem:[%s145 + $0xd8] sm:%s137] %v200
                %v202 = vld [vmem:[%s144 + $0x1c0] sm:%s137]
                %203 = vst [vmem:[%s145 + $0xe0] sm:%s137] %v202
                %v204 = vld [vmem:[%s144 + $0x1d0] sm:%s137]
                %205 = vst [vmem:[%s145 + $0xe8] sm:%s137] %v204
                %v206 = vld [vmem:[%s144 + $0x1e0] sm:%s137]
                %207 = vst [vmem:[%s145 + $0xf0] sm:%s137] %v206
                %v208 = vld [vmem:[%s144 + $0x1f0] sm:%s137]
                %209 = vst [vmem:[%s145 + $0xf8] sm:%s137] %v208
              $region41: #{graph_convolution.3} parent=35 // loop_footer
                %s143 = sadd.s32 1, %s139
              $region42: #{graph_convolution.3} parent=35 // loop_footer_branch
                %138 = sbr.rel target = $region38
              $region43: #{graph_convolution.3} parent=35 // loop_exit
                _
            $region36: #{graph_convolution.3} parent=27 // pred_fallthru
              _
          $region28: #{graph_convolution.3} parent=23 // pred_fallthru
            _
          %286 = vnop
        $region24: #{graph_convolution.3} parent=19 // pred_fallthru
          _
      $region20: #{graph_convolution.3} parent=5 // pred_fallthru
        _
      %p287 = scmp.le.s32.totalorder 1, %s8
      %p288 = scmp.lt.s32.totalorder %s8, 5
      %p289 = pnand %p287, %p288
      %p290 = pneg %p289
      // Predicated region
      $region59: #{graph_convolution.3} parent=5 // pred_check
        _
      $region60: #{graph_convolution.3} parent=5 // pred_check_branch
        %292 = sbr.rel (%p289) target = $region62
      $region61: #{graph_convolution.3} parent=5 // pred_region
        %s293 = ssub.s32 %s8, 1
        %s294 = sand.u32 %s35, 1
        %s295 = sand.u32 %s35, 1
        %s296 = smul.addr %s295, 256
        %s297 = scalar_lea.vmem [#allocation3], %s296
        // Predicated region
        $region63: #{graph_convolution.3} parent=61 // pred_check
          %p298 = pneg %p48
        $region64: #{graph_convolution.3} parent=61 // pred_check_branch
          %300 = sbr.rel (%p298) target = $region66
        $region65: #{graph_convolution.3} parent=61 // pred_region
          _
        $region66: #{graph_convolution.3} parent=61 // pred_fallthru
          _
        %s301 = sand.u32 %s35, 1
        %s302 = sand.u32 %s35, 1
        %s303 = smul.addr %s302, 256
        %s304 = scalar_lea.vmem [#allocation3], %s303
        %p305 = pneg %p48
        %p306 = pneg %p45
        %p307 = pneg %p69
        %p308 = pneg %p66
        %p309 = pneg %p95
        %p310 = pneg %p92
        %s311 = smul.u32 32, %s17
        %p312 = scmp.lt.s32.totalorder %s311, 63
        %s313 = scalar_select %p312, %s311, 63
        %s314 = smul.addr %s313, 8
        %s315 = scalar_lea.vmem %s2, %s314
        %s316 = smul.u32 32, %s17
        %s317 = smul.u32 2, %s18
        %s318 = smul.u32 32, %s17
        %p319 = scmp.lt.s32.totalorder %s318, 63
        %s320 = scalar_select %p319, %s318, 63
        %s321 = smul.addr %s320, 8
        %s322 = scalar_lea.vmem %s2, %s321
        %s323 = smul.u32 32, %s17
        %p324 = scmp.eq.s32.totalorder %s18, 0
        // Predicated region
        $region67: #{graph_convolution.3} parent=61 // pred_check
          %p325 = pneg %p324
        $region68: #{graph_convolution.3} parent=61 // pred_check_branch
          %327 = sbr.rel (%p325) target = $region70
        $region69: #{graph_convolution.3} parent=61 // pred_region
          %328 = vst [vmem:[#allocation2] sm:$0xff] 0.0
          %329 = vst [vmem:[#allocation2 + $0x8] sm:$0xff] 0.0
          %330 = vst [vmem:[#allocation2 + $0x10] sm:$0xff] 0.0
          %331 = vst [vmem:[#allocation2 + $0x18] sm:$0xff] 0.0
          %332 = vst [vmem:[#allocation2 + $0x20] sm:$0xff] 0.0
          %333 = vst [vmem:[#allocation2 + $0x28] sm:$0xff] 0.0
          %334 = vst [vmem:[#allocation2 + $0x30] sm:$0xff] 0.0
          %335 = vst [vmem:[#allocation2 + $0x38] sm:$0xff] 0.0
          %336 = vst [vmem:[#allocation2 + $0x40] sm:$0xff] 0.0
          %337 = vst [vmem:[#allocation2 + $0x48] sm:$0xff] 0.0
          %338 = vst [vmem:[#allocation2 + $0x50] sm:$0xff] 0.0
          %339 = vst [vmem:[#allocation2 + $0x58] sm:$0xff] 0.0
          %340 = vst [vmem:[#allocation2 + $0x60] sm:$0xff] 0.0
          %341 = vst [vmem:[#allocation2 + $0x68] sm:$0xff] 0.0
          %342 = vst [vmem:[#allocation2 + $0x70] sm:$0xff] 0.0
          %343 = vst [vmem:[#allocation2 + $0x78] sm:$0xff] 0.0
          %344 = vst [vmem:[#allocation2 + $0x80] sm:$0xff] 0.0
          %345 = vst [vmem:[#allocation2 + $0x88] sm:$0xff] 0.0
          %346 = vst [vmem:[#allocation2 + $0x90] sm:$0xff] 0.0
          %347 = vst [vmem:[#allocation2 + $0x98] sm:$0xff] 0.0
          %348 = vst [vmem:[#allocation2 + $0xa0] sm:$0xff] 0.0
          %349 = vst [vmem:[#allocation2 + $0xa8] sm:$0xff] 0.0
          %350 = vst [vmem:[#allocation2 + $0xb0] sm:$0xff] 0.0
          %351 = vst [vmem:[#allocation2 + $0xb8] sm:$0xff] 0.0
          %352 = vst [vmem:[#allocation2 + $0xc0] sm:$0xff] 0.0
          %353 = vst [vmem:[#allocation2 + $0xc8] sm:$0xff] 0.0
          %354 = vst [vmem:[#allocation2 + $0xd0] sm:$0xff] 0.0
          %355 = vst [vmem:[#allocation2 + $0xd8] sm:$0xff] 0.0
          %356 = vst [vmem:[#allocation2 + $0xe0] sm:$0xff] 0.0
          %357 = vst [vmem:[#allocation2 + $0xe8] sm:$0xff] 0.0
          %358 = vst [vmem:[#allocation2 + $0xf0] sm:$0xff] 0.0
          %359 = vst [vmem:[#allocation2 + $0xf8] sm:$0xff] 0.0
        $region70: #{graph_convolution.3} parent=61 // pred_fallthru
          _
        %s360 = smul.u32 %s18, 256
        %s361 = sshra.s32 %s360, 3
        %s362 = sand.u32 %s360, 7
        %s363 = smul.addr %s361, 4
        %s364 = scalar_lea.vmem %s1, %s363
        %v365 = vld [vmem:[%s364] sm:$0xf]
        %v366 = vld [vmem:[%s364 + $0x4] sm:$0xf]
        %v367 = vld [vmem:[%s364 + $0x8] sm:$0xf]
        %v368 = vld [vmem:[%s364 + $0xc] sm:$0xf]
        %v369 = vld [vmem:[%s364 + $0x10] sm:$0xf]
        %v370 = vld [vmem:[%s364 + $0x14] sm:$0xf]
        %v371 = vld [vmem:[%s364 + $0x18] sm:$0xf]
        %v372 = vld [vmem:[%s364 + $0x1c] sm:$0xf]
        %v373 = vld [vmem:[%s364 + $0x20] sm:$0xf]
        %v374 = vld [vmem:[%s364 + $0x24] sm:$0xf]
        %v375 = vld [vmem:[%s364 + $0x28] sm:$0xf]
        %v376 = vld [vmem:[%s364 + $0x2c] sm:$0xf]
        %v377 = vld [vmem:[%s364 + $0x30] sm:$0xf]
        %v378 = vld [vmem:[%s364 + $0x34] sm:$0xf]
        %v379 = vld [vmem:[%s364 + $0x38] sm:$0xf]
        %v380 = vld [vmem:[%s364 + $0x3c] sm:$0xf]
        %v381 = vld [vmem:[%s364 + $0x40] sm:$0xf]
        %v382 = vld [vmem:[%s364 + $0x44] sm:$0xf]
        %v383 = vld [vmem:[%s364 + $0x48] sm:$0xf]
        %v384 = vld [vmem:[%s364 + $0x4c] sm:$0xf]
        %v385 = vld [vmem:[%s364 + $0x50] sm:$0xf]
        %v386 = vld [vmem:[%s364 + $0x54] sm:$0xf]
        %v387 = vld [vmem:[%s364 + $0x58] sm:$0xf]
        %v388 = vld [vmem:[%s364 + $0x5c] sm:$0xf]
        %v389 = vld [vmem:[%s364 + $0x60] sm:$0xf]
        %v390 = vld [vmem:[%s364 + $0x64] sm:$0xf]
        %v391 = vld [vmem:[%s364 + $0x68] sm:$0xf]
        %v392 = vld [vmem:[%s364 + $0x6c] sm:$0xf]
        %v393 = vld [vmem:[%s364 + $0x70] sm:$0xf]
        %v394 = vld [vmem:[%s364 + $0x74] sm:$0xf]
        %v395 = vld [vmem:[%s364 + $0x78] sm:$0xf]
        %v396 = vld [vmem:[%s364 + $0x7c] sm:$0xf]
        %v397 = vld [vmem:[#allocation2] sm:$0xff]
        %v398 = vld [vmem:[#allocation2 + $0x8] sm:$0xff]
        %v399 = vld [vmem:[#allocation2 + $0x10] sm:$0xff]
        %v400 = vld [vmem:[#allocation2 + $0x18] sm:$0xff]
        %v401 = vld [vmem:[#allocation2 + $0x20] sm:$0xff]
        %v402 = vld [vmem:[#allocation2 + $0x28] sm:$0xff]
        %v403 = vld [vmem:[#allocation2 + $0x30] sm:$0xff]
        %v404 = vld [vmem:[#allocation2 + $0x38] sm:$0xff]
        %v405 = vld [vmem:[#allocation2 + $0x40] sm:$0xff]
        %v406 = vld [vmem:[#allocation2 + $0x48] sm:$0xff]
        %v407 = vld [vmem:[#allocation2 + $0x50] sm:$0xff]
        %v408 = vld [vmem:[#allocation2 + $0x58] sm:$0xff]
        %v409 = vld [vmem:[#allocation2 + $0x60] sm:$0xff]
        %v410 = vld [vmem:[#allocation2 + $0x68] sm:$0xff]
        %v411 = vld [vmem:[#allocation2 + $0x70] sm:$0xff]
        %v412 = vld [vmem:[#allocation2 + $0x78] sm:$0xff]
        %v413 = vld [vmem:[#allocation2 + $0x80] sm:$0xff]
        %v414 = vld [vmem:[#allocation2 + $0x88] sm:$0xff]
        %v415 = vld [vmem:[#allocation2 + $0x90] sm:$0xff]
        %v416 = vld [vmem:[#allocation2 + $0x98] sm:$0xff]
        %v417 = vld [vmem:[#allocation2 + $0xa0] sm:$0xff]
        %v418 = vld [vmem:[#allocation2 + $0xa8] sm:$0xff]
        %v419 = vld [vmem:[#allocation2 + $0xb0] sm:$0xff]
        %v420 = vld [vmem:[#allocation2 + $0xb8] sm:$0xff]
        %v421 = vld [vmem:[#allocation2 + $0xc0] sm:$0xff]
        %v422 = vld [vmem:[#allocation2 + $0xc8] sm:$0xff]
        %v423 = vld [vmem:[#allocation2 + $0xd0] sm:$0xff]
        %v424 = vld [vmem:[#allocation2 + $0xd8] sm:$0xff]
        %v425 = vld [vmem:[#allocation2 + $0xe0] sm:$0xff]
        %v426 = vld [vmem:[#allocation2 + $0xe8] sm:$0xff]
        %v427 = vld [vmem:[#allocation2 + $0xf0] sm:$0xff]
        %v428 = vld [vmem:[#allocation2 + $0xf8] sm:$0xff]
        %v429 = vld [vmem:[%s297] sm:$0xff]
        %v430 = vld [vmem:[%s297 + $0x8] sm:$0xff]
        %v431 = vld [vmem:[%s297 + $0x10] sm:$0xff]
        %v432 = vld [vmem:[%s297 + $0x18] sm:$0xff]
        %v433 = vld [vmem:[%s297 + $0x20] sm:$0xff]
        %v434 = vld [vmem:[%s297 + $0x28] sm:$0xff]
        %v435 = vld [vmem:[%s297 + $0x30] sm:$0xff]
        %v436 = vld [vmem:[%s297 + $0x38] sm:$0xff]
        %v437 = vld [vmem:[%s297 + $0x40] sm:$0xff]
        %v438 = vld [vmem:[%s297 + $0x48] sm:$0xff]
        %v439 = vld [vmem:[%s297 + $0x50] sm:$0xff]
        %v440 = vld [vmem:[%s297 + $0x58] sm:$0xff]
        %v441 = vld [vmem:[%s297 + $0x60] sm:$0xff]
        %v442 = vld [vmem:[%s297 + $0x68] sm:$0xff]
        %v443 = vld [vmem:[%s297 + $0x70] sm:$0xff]
        %v444 = vld [vmem:[%s297 + $0x78] sm:$0xff]
        %v445 = vld [vmem:[%s297 + $0x80] sm:$0xff]
        %v446 = vld [vmem:[%s297 + $0x88] sm:$0xff]
        %v447 = vld [vmem:[%s297 + $0x90] sm:$0xff]
        %v448 = vld [vmem:[%s297 + $0x98] sm:$0xff]
        %v449 = vld [vmem:[%s297 + $0xa0] sm:$0xff]
        %v450 = vld [vmem:[%s297 + $0xa8] sm:$0xff]
        %v451 = vld [vmem:[%s297 + $0xb0] sm:$0xff]
        %v452 = vld [vmem:[%s297 + $0xb8] sm:$0xff]
        %v453 = vld [vmem:[%s297 + $0xc0] sm:$0xff]
        %v454 = vld [vmem:[%s297 + $0xc8] sm:$0xff]
        %v455 = vld [vmem:[%s297 + $0xd0] sm:$0xff]
        %v456 = vld [vmem:[%s297 + $0xd8] sm:$0xff]
        %v457 = vld [vmem:[%s297 + $0xe0] sm:$0xff]
        %v458 = vld [vmem:[%s297 + $0xe8] sm:$0xff]
        %v459 = vld [vmem:[%s297 + $0xf0] sm:$0xff]
        %v460 = vld [vmem:[%s297 + $0xf8] sm:$0xff]
        %v493 = vunpack.c.l.b16 %v429
        %v494 = vunpack.c.h.b16 %v429
        %v495 = vunpack.c.l.b16 %v430
        %v496 = vunpack.c.h.b16 %v430
        %v497 = vunpack.c.l.b16 %v431
        %v498 = vunpack.c.h.b16 %v431
        %v499 = vunpack.c.l.b16 %v432
        %v500 = vunpack.c.h.b16 %v432
        %v501 = vunpack.c.l.b16 %v433
        %v502 = vunpack.c.h.b16 %v433
        %v503 = vunpack.c.l.b16 %v434
        %v504 = vunpack.c.h.b16 %v434
        %v505 = vunpack.c.l.b16 %v435
        %v506 = vunpack.c.h.b16 %v435
        %v507 = vunpack.c.l.b16 %v436
        %v508 = vunpack.c.h.b16 %v436
        %v509 = vunpack.c.l.b16 %v437
        %v510 = vunpack.c.h.b16 %v437
        %v511 = vunpack.c.l.b16 %v438
        %v512 = vunpack.c.h.b16 %v438
        %v513 = vunpack.c.l.b16 %v439
        %v514 = vunpack.c.h.b16 %v439
        %v515 = vunpack.c.l.b16 %v440
        %v516 = vunpack.c.h.b16 %v440
        %v517 = vunpack.c.l.b16 %v441
        %v518 = vunpack.c.h.b16 %v441
        %v519 = vunpack.c.l.b16 %v442
        %v520 = vunpack.c.h.b16 %v442
        %v521 = vunpack.c.l.b16 %v443
        %v522 = vunpack.c.h.b16 %v443
        %v523 = vunpack.c.l.b16 %v444
        %v524 = vunpack.c.h.b16 %v444
        %v525 = vunpack.c.l.b16 %v445
        %v526 = vunpack.c.h.b16 %v445
        %v527 = vunpack.c.l.b16 %v446
        %v528 = vunpack.c.h.b16 %v446
        %v529 = vunpack.c.l.b16 %v447
        %v530 = vunpack.c.h.b16 %v447
        %v531 = vunpack.c.l.b16 %v448
        %v532 = vunpack.c.h.b16 %v448
        %v533 = vunpack.c.l.b16 %v449
        %v534 = vunpack.c.h.b16 %v449
        %v535 = vunpack.c.l.b16 %v450
        %v536 = vunpack.c.h.b16 %v450
        %v537 = vunpack.c.l.b16 %v451
        %v538 = vunpack.c.h.b16 %v451
        %v539 = vunpack.c.l.b16 %v452
        %v540 = vunpack.c.h.b16 %v452
        %v541 = vunpack.c.l.b16 %v453
        %v542 = vunpack.c.h.b16 %v453
        %v543 = vunpack.c.l.b16 %v454
        %v544 = vunpack.c.h.b16 %v454
        %v545 = vunpack.c.l.b16 %v455
        %v546 = vunpack.c.h.b16 %v455
        %v547 = vunpack.c.l.b16 %v456
        %v548 = vunpack.c.h.b16 %v456
        %v549 = vunpack.c.l.b16 %v457
        %v550 = vunpack.c.h.b16 %v457
        %v551 = vunpack.c.l.b16 %v458
        %v552 = vunpack.c.h.b16 %v458
        %v553 = vunpack.c.l.b16 %v459
        %v554 = vunpack.c.h.b16 %v459
        %v555 = vunpack.c.l.b16 %v460
        %v556 = vunpack.c.h.b16 %v460
        %v557 = vpack.c.b16 %v495, %v493
        %v558 = vpack.c.b16 %v496, %v494
        %v559 = vpack.c.b16 %v499, %v497
        %v560 = vpack.c.b16 %v500, %v498
        %v561 = vpack.c.b16 %v503, %v501
        %v562 = vpack.c.b16 %v504, %v502
        %v563 = vpack.c.b16 %v507, %v505
        %v564 = vpack.c.b16 %v508, %v506
        %v565 = vpack.c.b16 %v511, %v509
        %v566 = vpack.c.b16 %v512, %v510
        %v567 = vpack.c.b16 %v515, %v513
        %v568 = vpack.c.b16 %v516, %v514
        %v569 = vpack.c.b16 %v519, %v517
        %v570 = vpack.c.b16 %v520, %v518
        %v571 = vpack.c.b16 %v523, %v521
        %v572 = vpack.c.b16 %v524, %v522
        %v573 = vpack.c.b16 %v527, %v525
        %v574 = vpack.c.b16 %v528, %v526
        %v575 = vpack.c.b16 %v531, %v529
        %v576 = vpack.c.b16 %v532, %v530
        %v577 = vpack.c.b16 %v535, %v533
        %v578 = vpack.c.b16 %v536, %v534
        %v579 = vpack.c.b16 %v539, %v537
        %v580 = vpack.c.b16 %v540, %v538
        %v581 = vpack.c.b16 %v543, %v541
        %v582 = vpack.c.b16 %v544, %v542
        %v583 = vpack.c.b16 %v547, %v545
        %v584 = vpack.c.b16 %v548, %v546
        %v585 = vpack.c.b16 %v551, %v549
        %v586 = vpack.c.b16 %v552, %v550
        %v587 = vpack.c.b16 %v555, %v553
        %v588 = vpack.c.b16 %v556, %v554
        %v653 = vunpack.c.l.b16 %v365
        %v654 = vunpack.c.l.b16 %v366
        %v655 = vunpack.c.l.b16 %v367
        %v656 = vunpack.c.l.b16 %v368
        %v657 = vunpack.c.l.b16 %v369
        %v658 = vunpack.c.l.b16 %v370
        %v659 = vunpack.c.l.b16 %v371
        %v660 = vunpack.c.l.b16 %v372
        %v661 = vunpack.c.l.b16 %v373
        %v662 = vunpack.c.l.b16 %v374
        %v663 = vunpack.c.l.b16 %v375
        %v664 = vunpack.c.l.b16 %v376
        %v665 = vunpack.c.l.b16 %v377
        %v666 = vunpack.c.l.b16 %v378
        %v667 = vunpack.c.l.b16 %v379
        %v668 = vunpack.c.l.b16 %v380
        %v669 = vunpack.c.l.b16 %v381
        %v670 = vunpack.c.l.b16 %v382
        %v671 = vunpack.c.l.b16 %v383
        %v672 = vunpack.c.l.b16 %v384
        %v673 = vunpack.c.l.b16 %v385
        %v674 = vunpack.c.l.b16 %v386
        %v675 = vunpack.c.l.b16 %v387
        %v676 = vunpack.c.l.b16 %v388
        %v677 = vunpack.c.l.b16 %v389
        %v678 = vunpack.c.l.b16 %v390
        %v679 = vunpack.c.l.b16 %v391
        %v680 = vunpack.c.l.b16 %v392
        %v681 = vunpack.c.l.b16 %v393
        %v682 = vunpack.c.l.b16 %v394
        %v683 = vunpack.c.l.b16 %v395
        %v684 = vunpack.c.l.b16 %v396
        %v685 = vpack.c.b16 %v654, %v653
        %v686 = vpack.c.b16 %v656, %v655
        %v687 = vpack.c.b16 %v658, %v657
        %v688 = vpack.c.b16 %v660, %v659
        %v689 = vpack.c.b16 %v662, %v661
        %v690 = vpack.c.b16 %v664, %v663
        %v691 = vpack.c.b16 %v666, %v665
        %v692 = vpack.c.b16 %v668, %v667
        %v693 = vpack.c.b16 %v670, %v669
        %v694 = vpack.c.b16 %v672, %v671
        %v695 = vpack.c.b16 %v674, %v673
        %v696 = vpack.c.b16 %v676, %v675
        %v697 = vpack.c.b16 %v678, %v677
        %v698 = vpack.c.b16 %v680, %v679
        %v699 = vpack.c.b16 %v682, %v681
        %v700 = vpack.c.b16 %v684, %v683
        %717 = vmatpush.bf16.msra.mxu0 %v692
        %718 = vmatpush.bf16.msra.mxu0 %v691
        %719 = vmatpush.bf16.msra.mxu0 %v690
        %720 = vmatpush.bf16.msra.mxu0 %v689
        %721 = vmatpush.bf16.msra.mxu0 %v688
        %722 = vmatpush.bf16.msra.mxu0 %v687
        %723 = vmatpush.bf16.msra.mxu0 %v686
        %724 = vmatpush.bf16.msra.mxu0 %v685
        %725 = vmatmul.bf16.gmra.mxu0 %v557
        %v726 = vpop.f32.mrf.mxu0
        %v727 = vadd.f32 0.0, %v726
        %v728 = vpop.f32.mrf.mxu0
        %v729 = vadd.f32 0.0, %v728
        %730 = vmatmul.bf16.gmra.mxu0 %v559
        %v731 = vpop.f32.mrf.mxu0
        %v732 = vadd.f32 0.0, %v731
        %v733 = vpop.f32.mrf.mxu0
        %v734 = vadd.f32 0.0, %v733
        %735 = vmatmul.bf16.gmra.mxu0 %v561
        %v736 = vpop.f32.mrf.mxu0
        %v737 = vadd.f32 0.0, %v736
        %v738 = vpop.f32.mrf.mxu0
        %v739 = vadd.f32 0.0, %v738
        %740 = vmatmul.bf16.gmra.mxu0 %v563
        %v741 = vpop.f32.mrf.mxu0
        %v742 = vadd.f32 0.0, %v741
        %v743 = vpop.f32.mrf.mxu0
        %v744 = vadd.f32 0.0, %v743
        %745 = vmatmul.bf16.gmra.mxu0 %v565
        %v746 = vpop.f32.mrf.mxu0
        %v747 = vadd.f32 0.0, %v746
        %v748 = vpop.f32.mrf.mxu0
        %v749 = vadd.f32 0.0, %v748
        %750 = vmatmul.bf16.gmra.mxu0 %v567
        %v751 = vpop.f32.mrf.mxu0
        %v752 = vadd.f32 0.0, %v751
        %v753 = vpop.f32.mrf.mxu0
        %v754 = vadd.f32 0.0, %v753
        %755 = vmatmul.bf16.gmra.mxu0 %v569
        %v756 = vpop.f32.mrf.mxu0
        %v757 = vadd.f32 0.0, %v756
        %v758 = vpop.f32.mrf.mxu0
        %v759 = vadd.f32 0.0, %v758
        %760 = vmatmul.bf16.gmra.mxu0 %v571
        %v761 = vpop.f32.mrf.mxu0
        %v762 = vadd.f32 0.0, %v761
        %v763 = vpop.f32.mrf.mxu0
        %v764 = vadd.f32 0.0, %v763
        %765 = vmatmul.bf16.gmra.mxu0 %v573
        %v766 = vpop.f32.mrf.mxu0
        %v767 = vadd.f32 0.0, %v766
        %v768 = vpop.f32.mrf.mxu0
        %v769 = vadd.f32 0.0, %v768
        %770 = vmatmul.bf16.gmra.mxu0 %v575
        %v771 = vpop.f32.mrf.mxu0
        %v772 = vadd.f32 0.0, %v771
        %v773 = vpop.f32.mrf.mxu0
        %v774 = vadd.f32 0.0, %v773
        %775 = vmatmul.bf16.gmra.mxu0 %v577
        %v776 = vpop.f32.mrf.mxu0
        %v777 = vadd.f32 0.0, %v776
        %v778 = vpop.f32.mrf.mxu0
        %v779 = vadd.f32 0.0, %v778
        %780 = vmatmul.bf16.gmra.mxu0 %v579
        %v781 = vpop.f32.mrf.mxu0
        %v782 = vadd.f32 0.0, %v781
        %v783 = vpop.f32.mrf.mxu0
        %v784 = vadd.f32 0.0, %v783
        %785 = vmatmul.bf16.gmra.mxu0 %v581
        %v786 = vpop.f32.mrf.mxu0
        %v787 = vadd.f32 0.0, %v786
        %v788 = vpop.f32.mrf.mxu0
        %v789 = vadd.f32 0.0, %v788
        %790 = vmatmul.bf16.gmra.mxu0 %v583
        %v791 = vpop.f32.mrf.mxu0
        %v792 = vadd.f32 0.0, %v791
        %v793 = vpop.f32.mrf.mxu0
        %v794 = vadd.f32 0.0, %v793
        %795 = vmatmul.bf16.gmra.mxu0 %v585
        %v796 = vpop.f32.mrf.mxu0
        %v797 = vadd.f32 0.0, %v796
        %v798 = vpop.f32.mrf.mxu0
        %v799 = vadd.f32 0.0, %v798
        %800 = vmatmul.bf16.gmra.mxu0 %v587
        %v801 = vpop.f32.mrf.mxu0
        %v802 = vadd.f32 0.0, %v801
        %v803 = vpop.f32.mrf.mxu0
        %v804 = vadd.f32 0.0, %v803
        %805 = vdwg.mxu0
        %806 = vmatpush.bf16.msra.mxu0 %v700
        %807 = vmatpush.bf16.msra.mxu0 %v699
        %808 = vmatpush.bf16.msra.mxu0 %v698
        %809 = vmatpush.bf16.msra.mxu0 %v697
        %810 = vmatpush.bf16.msra.mxu0 %v696
        %811 = vmatpush.bf16.msra.mxu0 %v695
        %812 = vmatpush.bf16.msra.mxu0 %v694
        %813 = vmatpush.bf16.msra.mxu0 %v693
        %814 = vmatmul.bf16.gmra.mxu0 %v558
        %v815 = vpop.f32.mrf.mxu0
        %v816 = vadd.f32 %v727, %v815
        %v817 = vpop.f32.mrf.mxu0
        %v818 = vadd.f32 %v729, %v817
        %819 = vmatmul.bf16.gmra.mxu0 %v560
        %v820 = vpop.f32.mrf.mxu0
        %v821 = vadd.f32 %v732, %v820
        %v822 = vpop.f32.mrf.mxu0
        %v823 = vadd.f32 %v734, %v822
        %824 = vmatmul.bf16.gmra.mxu0 %v562
        %v825 = vpop.f32.mrf.mxu0
        %v826 = vadd.f32 %v737, %v825
        %v827 = vpop.f32.mrf.mxu0
        %v828 = vadd.f32 %v739, %v827
        %829 = vmatmul.bf16.gmra.mxu0 %v564
        %v830 = vpop.f32.mrf.mxu0
        %v831 = vadd.f32 %v742, %v830
        %v832 = vpop.f32.mrf.mxu0
        %v833 = vadd.f32 %v744, %v832
        %834 = vmatmul.bf16.gmra.mxu0 %v566
        %v835 = vpop.f32.mrf.mxu0
        %v836 = vadd.f32 %v747, %v835
        %v837 = vpop.f32.mrf.mxu0
        %v838 = vadd.f32 %v749, %v837
        %839 = vmatmul.bf16.gmra.mxu0 %v568
        %v840 = vpop.f32.mrf.mxu0
        %v841 = vadd.f32 %v752, %v840
        %v842 = vpop.f32.mrf.mxu0
        %v843 = vadd.f32 %v754, %v842
        %844 = vmatmul.bf16.gmra.mxu0 %v570
        %v845 = vpop.f32.mrf.mxu0
        %v846 = vadd.f32 %v757, %v845
        %v847 = vpop.f32.mrf.mxu0
        %v848 = vadd.f32 %v759, %v847
        %849 = vmatmul.bf16.gmra.mxu0 %v572
        %v850 = vpop.f32.mrf.mxu0
        %v851 = vadd.f32 %v762, %v850
        %v852 = vpop.f32.mrf.mxu0
        %v853 = vadd.f32 %v764, %v852
        %854 = vmatmul.bf16.gmra.mxu0 %v574
        %v855 = vpop.f32.mrf.mxu0
        %v856 = vadd.f32 %v767, %v855
        %v857 = vpop.f32.mrf.mxu0
        %v858 = vadd.f32 %v769, %v857
        %859 = vmatmul.bf16.gmra.mxu0 %v576
        %v860 = vpop.f32.mrf.mxu0
        %v861 = vadd.f32 %v772, %v860
        %v862 = vpop.f32.mrf.mxu0
        %v863 = vadd.f32 %v774, %v862
        %864 = vmatmul.bf16.gmra.mxu0 %v578
        %v865 = vpop.f32.mrf.mxu0
        %v866 = vadd.f32 %v777, %v865
        %v867 = vpop.f32.mrf.mxu0
        %v868 = vadd.f32 %v779, %v867
        %869 = vmatmul.bf16.gmra.mxu0 %v580
        %v870 = vpop.f32.mrf.mxu0
        %v871 = vadd.f32 %v782, %v870
        %v872 = vpop.f32.mrf.mxu0
        %v873 = vadd.f32 %v784, %v872
        %874 = vmatmul.bf16.gmra.mxu0 %v582
        %v875 = vpop.f32.mrf.mxu0
        %v876 = vadd.f32 %v787, %v875
        %v877 = vpop.f32.mrf.mxu0
        %v878 = vadd.f32 %v789, %v877
        %879 = vmatmul.bf16.gmra.mxu0 %v584
        %v880 = vpop.f32.mrf.mxu0
        %v881 = vadd.f32 %v792, %v880
        %v882 = vpop.f32.mrf.mxu0
        %v883 = vadd.f32 %v794, %v882
        %884 = vmatmul.bf16.gmra.mxu0 %v586
        %v885 = vpop.f32.mrf.mxu0
        %v886 = vadd.f32 %v797, %v885
        %v887 = vpop.f32.mrf.mxu0
        %v888 = vadd.f32 %v799, %v887
        %889 = vmatmul.bf16.gmra.mxu0 %v588
        %v890 = vpop.f32.mrf.mxu0
        %v891 = vadd.f32 %v802, %v890
        %v892 = vpop.f32.mrf.mxu0
        %v893 = vadd.f32 %v804, %v892
        %894 = vdwg.mxu0
        %v895 = vadd.f32 %v397, %v816
        %v896 = vadd.f32 %v398, %v818
        %v897 = vadd.f32 %v399, %v821
        %v898 = vadd.f32 %v400, %v823
        %v899 = vadd.f32 %v401, %v826
        %v900 = vadd.f32 %v402, %v828
        %v901 = vadd.f32 %v403, %v831
        %v902 = vadd.f32 %v404, %v833
        %v903 = vadd.f32 %v405, %v836
        %v904 = vadd.f32 %v406, %v838
        %v905 = vadd.f32 %v407, %v841
        %v906 = vadd.f32 %v408, %v843
        %v907 = vadd.f32 %v409, %v846
        %v908 = vadd.f32 %v410, %v848
        %v909 = vadd.f32 %v411, %v851
        %v910 = vadd.f32 %v412, %v853
        %v911 = vadd.f32 %v413, %v856
        %v912 = vadd.f32 %v414, %v858
        %v913 = vadd.f32 %v415, %v861
        %v914 = vadd.f32 %v416, %v863
        %v915 = vadd.f32 %v417, %v866
        %v916 = vadd.f32 %v418, %v868
        %v917 = vadd.f32 %v419, %v871
        %v918 = vadd.f32 %v420, %v873
        %v919 = vadd.f32 %v421, %v876
        %v920 = vadd.f32 %v422, %v878
        %v921 = vadd.f32 %v423, %v881
        %v922 = vadd.f32 %v424, %v883
        %v923 = vadd.f32 %v425, %v886
        %v924 = vadd.f32 %v426, %v888
        %v925 = vadd.f32 %v427, %v891
        %v926 = vadd.f32 %v428, %v893
        %927 = vst [vmem:[#allocation2] sm:$0xff] %v895
        %928 = vst [vmem:[#allocation2 + $0x8] sm:$0xff] %v896
        %929 = vst [vmem:[#allocation2 + $0x10] sm:$0xff] %v897
        %930 = vst [vmem:[#allocation2 + $0x18] sm:$0xff] %v898
        %931 = vst [vmem:[#allocation2 + $0x20] sm:$0xff] %v899
        %932 = vst [vmem:[#allocation2 + $0x28] sm:$0xff] %v900
        %933 = vst [vmem:[#allocation2 + $0x30] sm:$0xff] %v901
        %934 = vst [vmem:[#allocation2 + $0x38] sm:$0xff] %v902
        %935 = vst [vmem:[#allocation2 + $0x40] sm:$0xff] %v903
        %936 = vst [vmem:[#allocation2 + $0x48] sm:$0xff] %v904
        %937 = vst [vmem:[#allocation2 + $0x50] sm:$0xff] %v905
        %938 = vst [vmem:[#allocation2 + $0x58] sm:$0xff] %v906
        %939 = vst [vmem:[#allocation2 + $0x60] sm:$0xff] %v907
        %940 = vst [vmem:[#allocation2 + $0x68] sm:$0xff] %v908
        %941 = vst [vmem:[#allocation2 + $0x70] sm:$0xff] %v909
        %942 = vst [vmem:[#allocation2 + $0x78] sm:$0xff] %v910
        %943 = vst [vmem:[#allocation2 + $0x80] sm:$0xff] %v911
        %944 = vst [vmem:[#allocation2 + $0x88] sm:$0xff] %v912
        %945 = vst [vmem:[#allocation2 + $0x90] sm:$0xff] %v913
        %946 = vst [vmem:[#allocation2 + $0x98] sm:$0xff] %v914
        %947 = vst [vmem:[#allocation2 + $0xa0] sm:$0xff] %v915
        %948 = vst [vmem:[#allocation2 + $0xa8] sm:$0xff] %v916
        %949 = vst [vmem:[#allocation2 + $0xb0] sm:$0xff] %v917
        %950 = vst [vmem:[#allocation2 + $0xb8] sm:$0xff] %v918
        %951 = vst [vmem:[#allocation2 + $0xc0] sm:$0xff] %v919
        %952 = vst [vmem:[#allocation2 + $0xc8] sm:$0xff] %v920
        %953 = vst [vmem:[#allocation2 + $0xd0] sm:$0xff] %v921
        %954 = vst [vmem:[#allocation2 + $0xd8] sm:$0xff] %v922
        %955 = vst [vmem:[#allocation2 + $0xe0] sm:$0xff] %v923
        %956 = vst [vmem:[#allocation2 + $0xe8] sm:$0xff] %v924
        %957 = vst [vmem:[#allocation2 + $0xf0] sm:$0xff] %v925
        %958 = vst [vmem:[#allocation2 + $0xf8] sm:$0xff] %v926
        %p959 = scmp.eq.s32.totalorder %s18, 1
        // Predicated region
        $region71: #{graph_convolution.3} parent=61 // pred_check
          %p960 = pneg %p959
        $region72: #{graph_convolution.3} parent=61 // pred_check_branch
          %962 = sbr.rel (%p960) target = $region74
        $region73: #{graph_convolution.3} parent=61 // pred_region
          %v963 = vld [vmem:[#allocation2] sm:$0xff]
          %v964 = vld [vmem:[#allocation2 + $0x8] sm:$0xff]
          %v965 = vld [vmem:[#allocation2 + $0x10] sm:$0xff]
          %v966 = vld [vmem:[#allocation2 + $0x18] sm:$0xff]
          %v967 = vld [vmem:[#allocation2 + $0x20] sm:$0xff]
          %v968 = vld [vmem:[#allocation2 + $0x28] sm:$0xff]
          %v969 = vld [vmem:[#allocation2 + $0x30] sm:$0xff]
          %v970 = vld [vmem:[#allocation2 + $0x38] sm:$0xff]
          %v971 = vld [vmem:[#allocation2 + $0x40] sm:$0xff]
          %v972 = vld [vmem:[#allocation2 + $0x48] sm:$0xff]
          %v973 = vld [vmem:[#allocation2 + $0x50] sm:$0xff]
          %v974 = vld [vmem:[#allocation2 + $0x58] sm:$0xff]
          %v975 = vld [vmem:[#allocation2 + $0x60] sm:$0xff]
          %v976 = vld [vmem:[#allocation2 + $0x68] sm:$0xff]
          %v977 = vld [vmem:[#allocation2 + $0x70] sm:$0xff]
          %v978 = vld [vmem:[#allocation2 + $0x78] sm:$0xff]
          %v979 = vld [vmem:[#allocation2 + $0x80] sm:$0xff]
          %v980 = vld [vmem:[#allocation2 + $0x88] sm:$0xff]
          %v981 = vld [vmem:[#allocation2 + $0x90] sm:$0xff]
          %v982 = vld [vmem:[#allocation2 + $0x98] sm:$0xff]
          %v983 = vld [vmem:[#allocation2 + $0xa0] sm:$0xff]
          %v984 = vld [vmem:[#allocation2 + $0xa8] sm:$0xff]
          %v985 = vld [vmem:[#allocation2 + $0xb0] sm:$0xff]
          %v986 = vld [vmem:[#allocation2 + $0xb8] sm:$0xff]
          %v987 = vld [vmem:[#allocation2 + $0xc0] sm:$0xff]
          %v988 = vld [vmem:[#allocation2 + $0xc8] sm:$0xff]
          %v989 = vld [vmem:[#allocation2 + $0xd0] sm:$0xff]
          %v990 = vld [vmem:[#allocation2 + $0xd8] sm:$0xff]
          %v991 = vld [vmem:[#allocation2 + $0xe0] sm:$0xff]
          %v992 = vld [vmem:[#allocation2 + $0xe8] sm:$0xff]
          %v993 = vld [vmem:[#allocation2 + $0xf0] sm:$0xff]
          %v994 = vld [vmem:[#allocation2 + $0xf8] sm:$0xff]
          %995 = vst [vmem:[%s322] sm:$0xff] %v963
          %996 = vst [vmem:[%s322 + $0x8] sm:$0xff] %v964
          %997 = vst [vmem:[%s322 + $0x10] sm:$0xff] %v965
          %998 = vst [vmem:[%s322 + $0x18] sm:$0xff] %v966
          %999 = vst [vmem:[%s322 + $0x20] sm:$0xff] %v967
          %1000 = vst [vmem:[%s322 + $0x28] sm:$0xff] %v968
          %1001 = vst [vmem:[%s322 + $0x30] sm:$0xff] %v969
          %1002 = vst [vmem:[%s322 + $0x38] sm:$0xff] %v970
          %1003 = vst [vmem:[%s322 + $0x40] sm:$0xff] %v971
          %1004 = vst [vmem:[%s322 + $0x48] sm:$0xff] %v972
          %1005 = vst [vmem:[%s322 + $0x50] sm:$0xff] %v973
          %1006 = vst [vmem:[%s322 + $0x58] sm:$0xff] %v974
          %1007 = vst [vmem:[%s322 + $0x60] sm:$0xff] %v975
          %1008 = vst [vmem:[%s322 + $0x68] sm:$0xff] %v976
          %1009 = vst [vmem:[%s322 + $0x70] sm:$0xff] %v977
          %1010 = vst [vmem:[%s322 + $0x78] sm:$0xff] %v978
          %1011 = vst [vmem:[%s322 + $0x80] sm:$0xff] %v979
          %1012 = vst [vmem:[%s322 + $0x88] sm:$0xff] %v980
          %1013 = vst [vmem:[%s322 + $0x90] sm:$0xff] %v981
          %1014 = vst [vmem:[%s322 + $0x98] sm:$0xff] %v982
          %1015 = vst [vmem:[%s322 + $0xa0] sm:$0xff] %v983
          %1016 = vst [vmem:[%s322 + $0xa8] sm:$0xff] %v984
          %1017 = vst [vmem:[%s322 + $0xb0] sm:$0xff] %v985
          %1018 = vst [vmem:[%s322 + $0xb8] sm:$0xff] %v986
          %1019 = vst [vmem:[%s322 + $0xc0] sm:$0xff] %v987
          %1020 = vst [vmem:[%s322 + $0xc8] sm:$0xff] %v988
          %1021 = vst [vmem:[%s322 + $0xd0] sm:$0xff] %v989
          %1022 = vst [vmem:[%s322 + $0xd8] sm:$0xff] %v990
          %1023 = vst [vmem:[%s322 + $0xe0] sm:$0xff] %v991
          %1024 = vst [vmem:[%s322 + $0xe8] sm:$0xff] %v992
          %1025 = vst [vmem:[%s322 + $0xf0] sm:$0xff] %v993
          %1026 = vst [vmem:[%s322 + $0xf8] sm:$0xff] %v994
        $region74: #{graph_convolution.3} parent=61 // pred_fallthru
          _
        %s1027 = smul.u32 32, %s17
        %p1028 = scmp.lt.s32.totalorder %s1027, 63
        %s1029 = scalar_select %p1028, %s1027, 63
        %s1030 = smul.addr %s1029, 8
        %s1031 = scalar_lea.vmem %s2, %s1030
        // Predicated region
        $region75: #{graph_convolution.3} parent=61 // pred_check
          %p1032 = pneg %p92
        $region76: #{graph_convolution.3} parent=61 // pred_check_branch
          %1034 = sbr.rel (%p1032) target = $region78
        $region77: #{graph_convolution.3} parent=61 // pred_region
          %s1035 = smul.u32 32, %s17
        $region78: #{graph_convolution.3} parent=61 // pred_fallthru
          _
      $region62: #{graph_convolution.3} parent=5 // pred_fallthru
        _
      %p1036 = scmp.le.s32.totalorder 2, %s8
      // Predicated region
      $region79: #{graph_convolution.3} parent=5 // pred_check
        %p1037 = pneg %p1036
      $region80: #{graph_convolution.3} parent=5 // pred_check_branch
        %1039 = sbr.rel (%p1037) target = $region82
      $region81: #{graph_convolution.3} parent=5 // pred_region
        %s1040 = ssub.s32 %s8, 2
        // Predicated region
        $region83: #{graph_convolution.3} parent=81 // pred_check
          %p1041 = pneg %p98
        $region84: #{graph_convolution.3} parent=81 // pred_check_branch
          %1043 = sbr.rel (%p1041) target = $region86
        $region85: #{graph_convolution.3} parent=81 // pred_region
          %s1044 = smul.u32 32, %s19
          %p1045 = scmp.lt.s32.totalorder %s1044, 63
          %s1046 = scalar_select %p1045, %s1044, 63
          %s1047 = smul.addr %s1046, 8
          %s1048 = scalar_lea.vmem %s2, %s1047
        $region86: #{graph_convolution.3} parent=81 // pred_fallthru
          _
      $region82: #{graph_convolution.3} parent=5 // pred_fallthru
        _
    $region6: #{graph_convolution.3} parent=1 // loop_footer
      %s12 = sadd.s32 1, %s8
    $region7: #{graph_convolution.3} parent=1 // loop_footer_branch
      %7 = sbr.rel target = $region3
    $region8: #{graph_convolution.3} parent=1 // loop_exit
      _

</llo_original>
